<compile_context>
chip_gen: v7x
topology: tpu7x:2x2x1
jax: 0.10.0
libtpu: 0.0.40
codegen_flags: <defaults>
</compile_context>

<pallas_src>
import functools

import numpy as np
import jax
import jax.numpy as jnp
from jax import lax
from jax.experimental import pallas as pl
from jax.experimental.pallas import tpu as pltpu


def _residual_group_kernel(x_ref, mask_ref, w_ref, scale_ref, o_ref, *,
                           img_w, C, n_resblocks, final_relu, compute_dtype):
    """x_ref/o_ref: (C, L); mask_ref: (9, L) f32; w_ref: (n_conv, C, 9C);
    scale_ref: (1,) f32 in SMEM.  L = images_per_block * H*W (lane axis)."""
    L = x_ref.shape[-1]
    W = img_w

    # Per-tap zero-padding masks, broadcast ONCE per kernel invocation
    # (JAX does not CSE broadcast_in_dim -> do not re-broadcast per conv/tap).
    mask_all = mask_ref[...]                                     # (9, L) f32
    masks = [jnp.broadcast_to(mask_all[t:t + 1, :], (C, L)) for t in range(9)]

    def shift(v, s):
        # result[p] = v[(p + s) mod L]; wrap-around only ever lands on
        # mask==0 lanes (image borders), so the cyclic roll is harmless.
        if s % L == 0:
            return v
        return pltpu.roll(v, shift=(-s) % L, axis=1)

    def conv3x3(h, layer):
        # h: (C, L) f32.  Build the 9-tap im2col slab (9C, L) with 2 row rolls
        # (+-W arbitrary-shift XLU rotate) + 6 cheap +-1 lane rolls, then ONE
        # (C, 9C) x (9C, L) MXU matmul with f32 accumulation.
        rows = (shift(h, -W), h, shift(h, W))                    # dy = -1, 0, +1
        parts = []
        t = 0
        for r in rows:
            for dx in (-1, 0, 1):
                parts.append(shift(r, dx) * masks[t])
                t += 1
        slab = jnp.concatenate(parts, axis=0)                    # (9C, L) f32
        return jnp.dot(w_ref[layer], slab.astype(compute_dtype),
                       preferred_element_type=jnp.float32)

    # body = n_resblocks x ResBlock, then the final ConvBNReLU2D (norm=None).
    h = x_ref[...].astype(jnp.float32)                           # (C, L)
    layer = 0
    for _ in range(n_resblocks):
        r = jnp.maximum(conv3x3(h, layer), 0.0)                  # conv + ReLU
        r = conv3x3(r, layer + 1)                                # conv (no act)
        h = jnp.maximum(r + h, 0.0)                              # relu(body + x)
        layer += 2
    h = conv3x3(h, layer)                                        # final conv
    if final_relu:                                               # act='ReLU'
        h = jnp.maximum(h, 0.0)
    # TODO(synk): norm='BN'/'IN'/'GN'/'WN'/'Adaptive' and the non-ReLU acts of
    #             the final ConvBNReLU2D are config-dependent; not implemented.

    # Scaled residual: re-read x from VMEM (already resident) instead of
    # keeping a full-plane f32 live range across all convs.
    out = h + scale_ref[0] * x_ref[...].astype(jnp.float32)
    o_ref[...] = out.astype(o_ref.dtype)


def residual_group(x, conv_weights, scale, *, n_resblocks, act="ReLU",
                   compute_dtype=jnp.bfloat16, batch_blocks=1):
    """ResidualGroup.forward for NCHW x with 3x3, bias-free convs.

    batch_blocks: number of grid steps; images are split between steps on
    image boundaries (no halo).  Use >=2 on v7x (2 TensorCores) when B >= 2.
    """
    B, C, H, W = x.shape
    HW = H * W
    n_conv = 2 * n_resblocks + 1
    assert len(conv_weights) == n_conv
    assert B % batch_blocks == 0
    imgs_per_block = B // batch_blocks
    L = imgs_per_block * HW                      # lanes per grid step

    # Weights: PyTorch (Cout, Cin, 3, 3) -> lane-dense im2col layout
    # (n_conv, Cout, 9*Cin), column order [ky, kx, cin] matching the slab.
    w_all = jnp.stack(
        [jnp.transpose(jnp.asarray(w, jnp.float32), (0, 2, 3, 1)).reshape(C, 9 * C)
         for w in conv_weights], axis=0).astype(compute_dtype)

    # Per-tap zero-padding validity masks, tiled over the images in a block
    # (pattern is identical for every image).
    ys, xs = np.arange(HW) // W, np.arange(HW) % W
    mask_np = np.empty((9, HW), np.float32)
    t = 0
    for dy in (-1, 0, 1):
        for dx in (-1, 0, 1):
            mask_np[t] = ((ys + dy >= 0) & (ys + dy < H) &
                          (xs + dx >= 0) & (xs + dx < W)).astype(np.float32)
            t += 1
    masks = jnp.asarray(np.tile(mask_np, (1, imgs_per_block)), jnp.float32)

    # Fold the batch into the lane axis: (B, C, H, W) -> (C, B*HW).
    x_folded = jnp.transpose(x, (1, 0, 2, 3)).reshape(C, B * HW)
    scale_arr = jnp.asarray(scale, jnp.float32).reshape(1)

    kernel = functools.partial(
        _residual_group_kernel, img_w=W, C=C, n_resblocks=n_resblocks,
        final_relu=(act == "ReLU"), compute_dtype=compute_dtype)

    out_folded = pl.pallas_call(
        kernel,
        out_shape=jax.ShapeDtypeStruct((C, B * HW), x.dtype),
        grid_spec=pl.GridSpec(
            grid=(batch_blocks,),
            in_specs=[
                pl.BlockSpec((C, L), lambda i: (0, i)),          # activations
                pl.BlockSpec((9, L), lambda i: (0, 0)),          # tap masks
                # Constant-index weight slab.  (Tiny here; for large C one
                # would additionally single-buffer it / fetch per layer.)
                pl.BlockSpec((n_conv, C, 9 * C), lambda i: (0, 0, 0)),
                pl.BlockSpec(memory_space=pltpu.MemorySpace.SMEM),  # scale
            ],
            out_specs=pl.BlockSpec((C, L), lambda i: (0, i)),
        ),
        compiler_params=pltpu.CompilerParams(
            dimension_semantics=("parallel",),
            # Well above this kernel's footprint, >= default scoped limit on
            # v5e (16 MiB) and within physical VMEM on every generation.
            vmem_limit_bytes=32 * 1024 * 1024,
        ),
    )(x_folded, masks, w_all, scale_arr)

    return jnp.transpose(out_folded.reshape(C, B, H, W), (1, 0, 2, 3))


# ----------------------------- pure-JAX reference -----------------------------

def _conv3x3_nchw(x, w):
    return lax.conv_general_dilated(
        x, w, window_strides=(1, 1), padding=((1, 1), (1, 1)),
        dimension_numbers=("NCHW", "OIHW", "NCHW"),
        precision=lax.Precision.HIGHEST)


def _reference(x, conv_weights, scale, *, n_resblocks, act="ReLU"):
    h = x.astype(jnp.float32)
    ws = [w.astype(jnp.float32) for w in conv_weights]
    for i in range(n_resblocks):
        r = jnp.maximum(_conv3x3_nchw(h, ws[2 * i]), 0.0)
        r = _conv3x3_nchw(r, ws[2 * i + 1])
        h = jnp.maximum(r + h, 0.0)
    h = _conv3x3_nchw(h, ws[-1])
    if act == "ReLU":
        h = jnp.maximum(h, 0.0)
    return (h + jnp.float32(scale) * x.astype(jnp.float32)).astype(x.dtype)


if __name__ == "__main__":
    key = jax.random.PRNGKey(0)
    B, C, H, W = 2, 4, 16, 16
    n_resblocks = 2
    n_conv = 2 * n_resblocks + 1
    act = "ReLU"

    keys = jax.random.split(key, n_conv + 1)
    x = jax.random.normal(keys[0], (B, C, H, W), dtype=jnp.float32)
    conv_weights = [
        0.1 * jax.random.normal(keys[i + 1], (C, C, 3, 3), dtype=jnp.float32)
        for i in range(n_conv)
    ]
    # Scale parameter (module initializes it to 1.0; use 0.5 so the scaled
    # residual path is actually exercised by the check).
    scale = 0.5

    out = residual_group(x, conv_weights, scale,
                         n_resblocks=n_resblocks, act=act)
    out = jax.block_until_ready(out)

    ref = _reference(x, conv_weights, scale, n_resblocks=n_resblocks, act=act)
    assert out.shape == x.shape, out.shape
    assert out.dtype == x.dtype, out.dtype
    err = float(jnp.max(jnp.abs(out - ref)))
    # bf16 MXU operands with f32 accumulation across 5 stacked convs:
    # tolerance sized for operand-rounding error, catches any structural bug.
    assert jnp.allclose(out, ref, atol=5e-2, rtol=5e-2), f"max err {err}"

    print("KERNEL_OK")
</pallas_src>

<mosaic_0001>
module attributes {stable_mosaic.version = 11 : i64} {
  func.func @_residual_group_kernel(%arg0: i32, %arg1: memref<4x512xf32, #tpu.memory_space<vmem>>, %arg2: memref<9x512xf32, #tpu.memory_space<vmem>>, %arg3: memref<5x4x36xbf16, #tpu.memory_space<vmem>>, %arg4: memref<1xf32, #tpu.memory_space<smem>>, %arg5: memref<4x512xf32, #tpu.memory_space<vmem>>) attributes {dimension_semantics = [#tpu.dimension_semantics<parallel>], iteration_bounds = array<i64: 1>, scalar_prefetch = 0 : i64, scratch_operands = 0 : i64, tpu.core_type = #tpu.core_type<tc>, window_params = [{transform_indices = @transform_0, window_bounds = array<i64: 4, 512>}, {pipeline_mode = #tpu.pipeline_mode<synchronous>, transform_indices = @transform_1, window_bounds = array<i64: 9, 512>}, {pipeline_mode = #tpu.pipeline_mode<synchronous>, transform_indices = @transform_2, window_bounds = array<i64: 5, 4, 36>}, {transform_indices = @transform_3, window_bounds = array<i64: 1>}, {transform_indices = @transform_4, window_bounds = array<i64: 4, 512>}]} {
    %c0 = arith.constant 0 : index
    %c0_0 = arith.constant 0 : index
    %0 = vector.load %arg2[%c0, %c0_0] : memref<9x512xf32, #tpu.memory_space<vmem>>, vector<9x512xf32>
    %1 = vector.extract_strided_slice %0 {offsets = [0, 0], sizes = [1, 512], strides = [1, 1]} : vector<9x512xf32> to vector<1x512xf32>
    %2 = vector.shape_cast %1 : vector<1x512xf32> to vector<1x512xf32>
    %3 = vector.broadcast %2 : vector<1x512xf32> to vector<4x512xf32>
    %4 = vector.extract_strided_slice %0 {offsets = [1, 0], sizes = [1, 512], strides = [1, 1]} : vector<9x512xf32> to vector<1x512xf32>
    %5 = vector.shape_cast %4 : vector<1x512xf32> to vector<1x512xf32>
    %6 = vector.broadcast %5 : vector<1x512xf32> to vector<4x512xf32>
    %7 = vector.extract_strided_slice %0 {offsets = [2, 0], sizes = [1, 512], strides = [1, 1]} : vector<9x512xf32> to vector<1x512xf32>
    %8 = vector.shape_cast %7 : vector<1x512xf32> to vector<1x512xf32>
    %9 = vector.broadcast %8 : vector<1x512xf32> to vector<4x512xf32>
    %10 = vector.extract_strided_slice %0 {offsets = [3, 0], sizes = [1, 512], strides = [1, 1]} : vector<9x512xf32> to vector<1x512xf32>
    %11 = vector.shape_cast %10 : vector<1x512xf32> to vector<1x512xf32>
    %12 = vector.broadcast %11 : vector<1x512xf32> to vector<4x512xf32>
    %13 = vector.extract_strided_slice %0 {offsets = [4, 0], sizes = [1, 512], strides = [1, 1]} : vector<9x512xf32> to vector<1x512xf32>
    %14 = vector.shape_cast %13 : vector<1x512xf32> to vector<1x512xf32>
    %15 = vector.broadcast %14 : vector<1x512xf32> to vector<4x512xf32>
    %16 = vector.extract_strided_slice %0 {offsets = [5, 0], sizes = [1, 512], strides = [1, 1]} : vector<9x512xf32> to vector<1x512xf32>
    %17 = vector.shape_cast %16 : vector<1x512xf32> to vector<1x512xf32>
    %18 = vector.broadcast %17 : vector<1x512xf32> to vector<4x512xf32>
    %19 = vector.extract_strided_slice %0 {offsets = [6, 0], sizes = [1, 512], strides = [1, 1]} : vector<9x512xf32> to vector<1x512xf32>
    %20 = vector.shape_cast %19 : vector<1x512xf32> to vector<1x512xf32>
    %21 = vector.broadcast %20 : vector<1x512xf32> to vector<4x512xf32>
    %22 = vector.extract_strided_slice %0 {offsets = [7, 0], sizes = [1, 512], strides = [1, 1]} : vector<9x512xf32> to vector<1x512xf32>
    %23 = vector.shape_cast %22 : vector<1x512xf32> to vector<1x512xf32>
    %24 = vector.broadcast %23 : vector<1x512xf32> to vector<4x512xf32>
    %25 = vector.extract_strided_slice %0 {offsets = [8, 0], sizes = [1, 512], strides = [1, 1]} : vector<9x512xf32> to vector<1x512xf32>
    %26 = vector.shape_cast %25 : vector<1x512xf32> to vector<1x512xf32>
    %27 = vector.broadcast %26 : vector<1x512xf32> to vector<4x512xf32>
    %c0_1 = arith.constant 0 : index
    %c0_2 = arith.constant 0 : index
    %28 = vector.load %arg1[%c0_1, %c0_2] : memref<4x512xf32, #tpu.memory_space<vmem>>, vector<4x512xf32>
    %c16_i32 = arith.constant 16 : i32
    %29 = tpu.dynamic_rotate %28 by %c16_i32 dim 1 : vector<4x512xf32>, i32 -> vector<4x512xf32>
    %c496_i32 = arith.constant 496 : i32
    %30 = tpu.dynamic_rotate %28 by %c496_i32 dim 1 : vector<4x512xf32>, i32 -> vector<4x512xf32>
    %c1_i32 = arith.constant 1 : i32
    %31 = tpu.dynamic_rotate %29 by %c1_i32 dim 1 : vector<4x512xf32>, i32 -> vector<4x512xf32>
    %32 = arith.mulf %31, %3 : vector<4x512xf32>
    %33 = arith.mulf %29, %6 : vector<4x512xf32>
    %c511_i32 = arith.constant 511 : i32
    %34 = tpu.dynamic_rotate %29 by %c511_i32 dim 1 : vector<4x512xf32>, i32 -> vector<4x512xf32>
    %35 = arith.mulf %34, %9 : vector<4x512xf32>
    %c1_i32_3 = arith.constant 1 : i32
    %36 = tpu.dynamic_rotate %28 by %c1_i32_3 dim 1 : vector<4x512xf32>, i32 -> vector<4x512xf32>
    %37 = arith.mulf %36, %12 : vector<4x512xf32>
    %38 = arith.mulf %28, %15 : vector<4x512xf32>
    %c511_i32_4 = arith.constant 511 : i32
    %39 = tpu.dynamic_rotate %28 by %c511_i32_4 dim 1 : vector<4x512xf32>, i32 -> vector<4x512xf32>
    %40 = arith.mulf %39, %18 : vector<4x512xf32>
    %c1_i32_5 = arith.constant 1 : i32
    %41 = tpu.dynamic_rotate %30 by %c1_i32_5 dim 1 : vector<4x512xf32>, i32 -> vector<4x512xf32>
    %42 = arith.mulf %41, %21 : vector<4x512xf32>
    %43 = arith.mulf %30, %24 : vector<4x512xf32>
    %c511_i32_6 = arith.constant 511 : i32
    %44 = tpu.dynamic_rotate %30 by %c511_i32_6 dim 1 : vector<4x512xf32>, i32 -> vector<4x512xf32>
    %45 = arith.mulf %44, %27 : vector<4x512xf32>
    %46 = tpu.concatenate %32, %33, %35, %37, %38, %40, %42, %43, %45 in 0 : vector<4x512xf32>, vector<4x512xf32>, vector<4x512xf32>, vector<4x512xf32>, vector<4x512xf32>, vector<4x512xf32>, vector<4x512xf32>, vector<4x512xf32>, vector<4x512xf32> -> vector<36x512xf32>
    %c0_7 = arith.constant 0 : index
    %c0_8 = arith.constant 0 : index
    %c0_9 = arith.constant 0 : index
    %47 = vector.load %arg3[%c0_7, %c0_8, %c0_9] : memref<5x4x36xbf16, #tpu.memory_space<vmem>>, vector<1x4x36xbf16>
    %48 = vector.shape_cast %47 : vector<1x4x36xbf16> to vector<4x36xbf16>
    %49 = arith.truncf %46 : vector<36x512xf32> to vector<36x512xbf16>
    %cst = arith.constant dense<0.000000e+00> : vector<4x512xf32>
    %50 = tpu.matmul %48, %49, %cst {dimension_numbers = #tpu.dot_dimension_numbers<[1], [0], [0], [1], [0, 0, 1, 1], [], []>} : vector<4x36xbf16>, vector<36x512xbf16>, vector<4x512xf32> -> vector<4x512xf32>
    %cst_10 = arith.constant 0.000000e+00 : f32
    %51 = vector.broadcast %cst_10 : f32 to vector<4x512xf32>
    %52 = arith.maximumf %50, %51 : vector<4x512xf32>
    %c16_i32_11 = arith.constant 16 : i32
    %53 = tpu.dynamic_rotate %52 by %c16_i32_11 dim 1 : vector<4x512xf32>, i32 -> vector<4x512xf32>
    %c496_i32_12 = arith.constant 496 : i32
    %54 = tpu.dynamic_rotate %52 by %c496_i32_12 dim 1 : vector<4x512xf32>, i32 -> vector<4x512xf32>
    %c1_i32_13 = arith.constant 1 : i32
    %55 = tpu.dynamic_rotate %53 by %c1_i32_13 dim 1 : vector<4x512xf32>, i32 -> vector<4x512xf32>
    %56 = arith.mulf %55, %3 : vector<4x512xf32>
    %57 = arith.mulf %53, %6 : vector<4x512xf32>
    %c511_i32_14 = arith.constant 511 : i32
    %58 = tpu.dynamic_rotate %53 by %c511_i32_14 dim 1 : vector<4x512xf32>, i32 -> vector<4x512xf32>
    %59 = arith.mulf %58, %9 : vector<4x512xf32>
    %c1_i32_15 = arith.constant 1 : i32
    %60 = tpu.dynamic_rotate %52 by %c1_i32_15 dim 1 : vector<4x512xf32>, i32 -> vector<4x512xf32>
    %61 = arith.mulf %60, %12 : vector<4x512xf32>
    %62 = arith.mulf %52, %15 : vector<4x512xf32>
    %c511_i32_16 = arith.constant 511 : i32
    %63 = tpu.dynamic_rotate %52 by %c511_i32_16 dim 1 : vector<4x512xf32>, i32 -> vector<4x512xf32>
    %64 = arith.mulf %63, %18 : vector<4x512xf32>
    %c1_i32_17 = arith.constant 1 : i32
    %65 = tpu.dynamic_rotate %54 by %c1_i32_17 dim 1 : vector<4x512xf32>, i32 -> vector<4x512xf32>
    %66 = arith.mulf %65, %21 : vector<4x512xf32>
    %67 = arith.mulf %54, %24 : vector<4x512xf32>
    %c511_i32_18 = arith.constant 511 : i32
    %68 = tpu.dynamic_rotate %54 by %c511_i32_18 dim 1 : vector<4x512xf32>, i32 -> vector<4x512xf32>
    %69 = arith.mulf %68, %27 : vector<4x512xf32>
    %70 = tpu.concatenate %56, %57, %59, %61, %62, %64, %66, %67, %69 in 0 : vector<4x512xf32>, vector<4x512xf32>, vector<4x512xf32>, vector<4x512xf32>, vector<4x512xf32>, vector<4x512xf32>, vector<4x512xf32>, vector<4x512xf32>, vector<4x512xf32> -> vector<36x512xf32>
    %c1 = arith.constant 1 : index
    %c0_19 = arith.constant 0 : index
    %c0_20 = arith.constant 0 : index
    %71 = vector.load %arg3[%c1, %c0_19, %c0_20] : memref<5x4x36xbf16, #tpu.memory_space<vmem>>, vector<1x4x36xbf16>
    %72 = vector.shape_cast %71 : vector<1x4x36xbf16> to vector<4x36xbf16>
    %73 = arith.truncf %70 : vector<36x512xf32> to vector<36x512xbf16>
    %cst_21 = arith.constant dense<0.000000e+00> : vector<4x512xf32>
    %74 = tpu.matmul %72, %73, %cst_21 {dimension_numbers = #tpu.dot_dimension_numbers<[1], [0], [0], [1], [0, 0, 1, 1], [], []>} : vector<4x36xbf16>, vector<36x512xbf16>, vector<4x512xf32> -> vector<4x512xf32>
    %75 = arith.addf %74, %28 : vector<4x512xf32>
    %cst_22 = arith.constant 0.000000e+00 : f32
    %76 = vector.broadcast %cst_22 : f32 to vector<4x512xf32>
    %77 = arith.maximumf %75, %76 : vector<4x512xf32>
    %c16_i32_23 = arith.constant 16 : i32
    %78 = tpu.dynamic_rotate %77 by %c16_i32_23 dim 1 : vector<4x512xf32>, i32 -> vector<4x512xf32>
    %c496_i32_24 = arith.constant 496 : i32
    %79 = tpu.dynamic_rotate %77 by %c496_i32_24 dim 1 : vector<4x512xf32>, i32 -> vector<4x512xf32>
    %c1_i32_25 = arith.constant 1 : i32
    %80 = tpu.dynamic_rotate %78 by %c1_i32_25 dim 1 : vector<4x512xf32>, i32 -> vector<4x512xf32>
    %81 = arith.mulf %80, %3 : vector<4x512xf32>
    %82 = arith.mulf %78, %6 : vector<4x512xf32>
    %c511_i32_26 = arith.constant 511 : i32
    %83 = tpu.dynamic_rotate %78 by %c511_i32_26 dim 1 : vector<4x512xf32>, i32 -> vector<4x512xf32>
    %84 = arith.mulf %83, %9 : vector<4x512xf32>
    %c1_i32_27 = arith.constant 1 : i32
    %85 = tpu.dynamic_rotate %77 by %c1_i32_27 dim 1 : vector<4x512xf32>, i32 -> vector<4x512xf32>
    %86 = arith.mulf %85, %12 : vector<4x512xf32>
    %87 = arith.mulf %77, %15 : vector<4x512xf32>
    %c511_i32_28 = arith.constant 511 : i32
    %88 = tpu.dynamic_rotate %77 by %c511_i32_28 dim 1 : vector<4x512xf32>, i32 -> vector<4x512xf32>
    %89 = arith.mulf %88, %18 : vector<4x512xf32>
    %c1_i32_29 = arith.constant 1 : i32
    %90 = tpu.dynamic_rotate %79 by %c1_i32_29 dim 1 : vector<4x512xf32>, i32 -> vector<4x512xf32>
    %91 = arith.mulf %90, %21 : vector<4x512xf32>
    %92 = arith.mulf %79, %24 : vector<4x512xf32>
    %c511_i32_30 = arith.constant 511 : i32
    %93 = tpu.dynamic_rotate %79 by %c511_i32_30 dim 1 : vector<4x512xf32>, i32 -> vector<4x512xf32>
    %94 = arith.mulf %93, %27 : vector<4x512xf32>
    %95 = tpu.concatenate %81, %82, %84, %86, %87, %89, %91, %92, %94 in 0 : vector<4x512xf32>, vector<4x512xf32>, vector<4x512xf32>, vector<4x512xf32>, vector<4x512xf32>, vector<4x512xf32>, vector<4x512xf32>, vector<4x512xf32>, vector<4x512xf32> -> vector<36x512xf32>
    %c2 = arith.constant 2 : index
    %c0_31 = arith.constant 0 : index
    %c0_32 = arith.constant 0 : index
    %96 = vector.load %arg3[%c2, %c0_31, %c0_32] : memref<5x4x36xbf16, #tpu.memory_space<vmem>>, vector<1x4x36xbf16>
    %97 = vector.shape_cast %96 : vector<1x4x36xbf16> to vector<4x36xbf16>
    %98 = arith.truncf %95 : vector<36x512xf32> to vector<36x512xbf16>
    %cst_33 = arith.constant dense<0.000000e+00> : vector<4x512xf32>
    %99 = tpu.matmul %97, %98, %cst_33 {dimension_numbers = #tpu.dot_dimension_numbers<[1], [0], [0], [1], [0, 0, 1, 1], [], []>} : vector<4x36xbf16>, vector<36x512xbf16>, vector<4x512xf32> -> vector<4x512xf32>
    %cst_34 = arith.constant 0.000000e+00 : f32
    %100 = vector.broadcast %cst_34 : f32 to vector<4x512xf32>
    %101 = arith.maximumf %99, %100 : vector<4x512xf32>
    %c16_i32_35 = arith.constant 16 : i32
    %102 = tpu.dynamic_rotate %101 by %c16_i32_35 dim 1 : vector<4x512xf32>, i32 -> vector<4x512xf32>
    %c496_i32_36 = arith.constant 496 : i32
    %103 = tpu.dynamic_rotate %101 by %c496_i32_36 dim 1 : vector<4x512xf32>, i32 -> vector<4x512xf32>
    %c1_i32_37 = arith.constant 1 : i32
    %104 = tpu.dynamic_rotate %102 by %c1_i32_37 dim 1 : vector<4x512xf32>, i32 -> vector<4x512xf32>
    %105 = arith.mulf %104, %3 : vector<4x512xf32>
    %106 = arith.mulf %102, %6 : vector<4x512xf32>
    %c511_i32_38 = arith.constant 511 : i32
    %107 = tpu.dynamic_rotate %102 by %c511_i32_38 dim 1 : vector<4x512xf32>, i32 -> vector<4x512xf32>
    %108 = arith.mulf %107, %9 : vector<4x512xf32>
    %c1_i32_39 = arith.constant 1 : i32
    %109 = tpu.dynamic_rotate %101 by %c1_i32_39 dim 1 : vector<4x512xf32>, i32 -> vector<4x512xf32>
    %110 = arith.mulf %109, %12 : vector<4x512xf32>
    %111 = arith.mulf %101, %15 : vector<4x512xf32>
    %c511_i32_40 = arith.constant 511 : i32
    %112 = tpu.dynamic_rotate %101 by %c511_i32_40 dim 1 : vector<4x512xf32>, i32 -> vector<4x512xf32>
    %113 = arith.mulf %112, %18 : vector<4x512xf32>
    %c1_i32_41 = arith.constant 1 : i32
    %114 = tpu.dynamic_rotate %103 by %c1_i32_41 dim 1 : vector<4x512xf32>, i32 -> vector<4x512xf32>
    %115 = arith.mulf %114, %21 : vector<4x512xf32>
    %116 = arith.mulf %103, %24 : vector<4x512xf32>
    %c511_i32_42 = arith.constant 511 : i32
    %117 = tpu.dynamic_rotate %103 by %c511_i32_42 dim 1 : vector<4x512xf32>, i32 -> vector<4x512xf32>
    %118 = arith.mulf %117, %27 : vector<4x512xf32>
    %119 = tpu.concatenate %105, %106, %108, %110, %111, %113, %115, %116, %118 in 0 : vector<4x512xf32>, vector<4x512xf32>, vector<4x512xf32>, vector<4x512xf32>, vector<4x512xf32>, vector<4x512xf32>, vector<4x512xf32>, vector<4x512xf32>, vector<4x512xf32> -> vector<36x512xf32>
    %c3 = arith.constant 3 : index
    %c0_43 = arith.constant 0 : index
    %c0_44 = arith.constant 0 : index
    %120 = vector.load %arg3[%c3, %c0_43, %c0_44] : memref<5x4x36xbf16, #tpu.memory_space<vmem>>, vector<1x4x36xbf16>
    %121 = vector.shape_cast %120 : vector<1x4x36xbf16> to vector<4x36xbf16>
    %122 = arith.truncf %119 : vector<36x512xf32> to vector<36x512xbf16>
    %cst_45 = arith.constant dense<0.000000e+00> : vector<4x512xf32>
    %123 = tpu.matmul %121, %122, %cst_45 {dimension_numbers = #tpu.dot_dimension_numbers<[1], [0], [0], [1], [0, 0, 1, 1], [], []>} : vector<4x36xbf16>, vector<36x512xbf16>, vector<4x512xf32> -> vector<4x512xf32>
    %124 = arith.addf %123, %77 : vector<4x512xf32>
    %cst_46 = arith.constant 0.000000e+00 : f32
    %125 = vector.broadcast %cst_46 : f32 to vector<4x512xf32>
    %126 = arith.maximumf %124, %125 : vector<4x512xf32>
    %c16_i32_47 = arith.constant 16 : i32
    %127 = tpu.dynamic_rotate %126 by %c16_i32_47 dim 1 : vector<4x512xf32>, i32 -> vector<4x512xf32>
    %c496_i32_48 = arith.constant 496 : i32
    %128 = tpu.dynamic_rotate %126 by %c496_i32_48 dim 1 : vector<4x512xf32>, i32 -> vector<4x512xf32>
    %c1_i32_49 = arith.constant 1 : i32
    %129 = tpu.dynamic_rotate %127 by %c1_i32_49 dim 1 : vector<4x512xf32>, i32 -> vector<4x512xf32>
    %130 = arith.mulf %129, %3 : vector<4x512xf32>
    %131 = arith.mulf %127, %6 : vector<4x512xf32>
    %c511_i32_50 = arith.constant 511 : i32
    %132 = tpu.dynamic_rotate %127 by %c511_i32_50 dim 1 : vector<4x512xf32>, i32 -> vector<4x512xf32>
    %133 = arith.mulf %132, %9 : vector<4x512xf32>
    %c1_i32_51 = arith.constant 1 : i32
    %134 = tpu.dynamic_rotate %126 by %c1_i32_51 dim 1 : vector<4x512xf32>, i32 -> vector<4x512xf32>
    %135 = arith.mulf %134, %12 : vector<4x512xf32>
    %136 = arith.mulf %126, %15 : vector<4x512xf32>
    %c511_i32_52 = arith.constant 511 : i32
    %137 = tpu.dynamic_rotate %126 by %c511_i32_52 dim 1 : vector<4x512xf32>, i32 -> vector<4x512xf32>
    %138 = arith.mulf %137, %18 : vector<4x512xf32>
    %c1_i32_53 = arith.constant 1 : i32
    %139 = tpu.dynamic_rotate %128 by %c1_i32_53 dim 1 : vector<4x512xf32>, i32 -> vector<4x512xf32>
    %140 = arith.mulf %139, %21 : vector<4x512xf32>
    %141 = arith.mulf %128, %24 : vector<4x512xf32>
    %c511_i32_54 = arith.constant 511 : i32
    %142 = tpu.dynamic_rotate %128 by %c511_i32_54 dim 1 : vector<4x512xf32>, i32 -> vector<4x512xf32>
    %143 = arith.mulf %142, %27 : vector<4x512xf32>
    %144 = tpu.concatenate %130, %131, %133, %135, %136, %138, %140, %141, %143 in 0 : vector<4x512xf32>, vector<4x512xf32>, vector<4x512xf32>, vector<4x512xf32>, vector<4x512xf32>, vector<4x512xf32>, vector<4x512xf32>, vector<4x512xf32>, vector<4x512xf32> -> vector<36x512xf32>
    %c4 = arith.constant 4 : index
    %c0_55 = arith.constant 0 : index
    %c0_56 = arith.constant 0 : index
    %145 = vector.load %arg3[%c4, %c0_55, %c0_56] : memref<5x4x36xbf16, #tpu.memory_space<vmem>>, vector<1x4x36xbf16>
    %146 = vector.shape_cast %145 : vector<1x4x36xbf16> to vector<4x36xbf16>
    %147 = arith.truncf %144 : vector<36x512xf32> to vector<36x512xbf16>
    %cst_57 = arith.constant dense<0.000000e+00> : vector<4x512xf32>
    %148 = tpu.matmul %146, %147, %cst_57 {dimension_numbers = #tpu.dot_dimension_numbers<[1], [0], [0], [1], [0, 0, 1, 1], [], []>} : vector<4x36xbf16>, vector<36x512xbf16>, vector<4x512xf32> -> vector<4x512xf32>
    %cst_58 = arith.constant 0.000000e+00 : f32
    %149 = vector.broadcast %cst_58 : f32 to vector<4x512xf32>
    %150 = arith.maximumf %148, %149 : vector<4x512xf32>
    %c0_59 = arith.constant 0 : index
    %151 = memref.load %arg4[%c0_59] : memref<1xf32, #tpu.memory_space<smem>>
    %c0_60 = arith.constant 0 : index
    %c0_61 = arith.constant 0 : index
    %152 = vector.load %arg1[%c0_60, %c0_61] : memref<4x512xf32, #tpu.memory_space<vmem>>, vector<4x512xf32>
    %153 = vector.broadcast %151 : f32 to vector<4x512xf32>
    %154 = arith.mulf %153, %152 : vector<4x512xf32>
    %155 = arith.addf %150, %154 : vector<4x512xf32>
    %c0_62 = arith.constant 0 : index
    %c0_63 = arith.constant 0 : index
    %156 = vector.load %arg5[%c0_62, %c0_63] : memref<4x512xf32, #tpu.memory_space<vmem>>, vector<4x512xf32>
    tpu.vector_store %arg5[%c0_62, %c0_63], %155 {strides = array<i32>} : memref<4x512xf32, #tpu.memory_space<vmem>>, vector<4x512xf32>,
    return
  }
  func.func @transform_0(%arg0: i32) -> (i32, i32) {
    %c0_i32 = arith.constant 0 : i32
    %c0_i32_0 = arith.constant 0 : i32
    return %c0_i32, %arg0 : i32, i32
  }
  func.func @transform_1(%arg0: i32) -> (i32, i32) {
    %c0_i32 = arith.constant 0 : i32
    %c0_i32_0 = arith.constant 0 : i32
    %c0_i32_1 = arith.constant 0 : i32
    return %c0_i32, %c0_i32_0 : i32, i32
  }
  func.func @transform_2(%arg0: i32) -> (i32, i32, i32) {
    %c0_i32 = arith.constant 0 : i32
    %c0_i32_0 = arith.constant 0 : i32
    %c0_i32_1 = arith.constant 0 : i32
    %c0_i32_2 = arith.constant 0 : i32
    return %c0_i32, %c0_i32_0, %c0_i32_1 : i32, i32, i32
  }
  func.func @transform_3(%arg0: i32) -> i32 {
    %c0_i32 = arith.constant 0 : i32
    %c0_i32_0 = arith.constant 0 : i32
    return %c0_i32 : i32
  }
  func.func @transform_4(%arg0: i32) -> (i32, i32) {
    %c0_i32 = arith.constant 0 : i32
    %c0_i32_0 = arith.constant 0 : i32
    return %c0_i32, %arg0 : i32, i32
  }
}

</mosaic_0001>

<llo_original>
// kernel: tpu_custom_call.1
$region0: #{tpu_custom_call.1}
  #allocation0 [shape = 'u32[]', space=smem, size = 0x4, offset = 0x4, fixed_abs, tag = 'smem constant byte address 0x4 - core index']
  #allocation1 [shape = 'u32[144,128]{1,0:T(1,128)}', space=vmem, size = 0x12000, scoped, tag = 'internal scratch']
  #allocation2 [shape = 'f32[1]{0:T(128)S(6)}', space=smem, size = 0x200, scoped, tag = 'scoped memory for tpu_custom_call.1']
  %s0 = inlined_call_operand.hbm [shape: f32[4,512], index: 0, kind: input, shape index: {}]
  %s1 = inlined_call_operand.hbm [shape: f32[9,512], index: 1, kind: input, shape index: {}]
  %s2 = inlined_call_operand.vmem [shape: bf16[5,4,36], index: 2, kind: input, shape index: {}]
  %s3 = inlined_call_operand.<no memory space> [shape: f32[1], index: 3, kind: input, shape index: {}]
  %s4 = inlined_call_operand.hbm [shape: f32[4,512], index: 4, kind: output, shape index: {}]
  %s5 = sld [smem:[#allocation0]]
  $region34: #{tpu_custom_call.1} parent=0
    _
  %s7 = ssub.s32 1, %s5
  %s8 = scalar_select 0, %s7, %s5
  %9 = sst [smem:[#allocation2]] %s3
  $region1: #{tpu_custom_call.1} parent=0
    #allocation3 [shape = 'u8[8192]{0}', space=vmem, size = 0x2000, scoped, tag = 'input window, operand 0, single buffered']
    #allocation4 [shape = 's32[1]{0}', space=sflag, size = 0x4, scoped, tag = 'scoped memory for tpu_custom_call.1']
    #allocation5 [shape = 's32[1]{0}', space=sflag, size = 0x4, scoped, tag = 'scoped memory for tpu_custom_call.1']
    #allocation6 [shape = 'u8[32768]{0}', space=vmem, size = 0x8000, scoped, tag = 'input window, operand 1, single buffered']
    #allocation7 [shape = 's32[1]{0}', space=sflag, size = 0x4, scoped, tag = 'scoped memory for tpu_custom_call.1']
    #allocation8 [shape = 'u8[8192]{0}', space=vmem, size = 0x2000, scoped, tag = 'output window, operand 0, single buffered']
    %10 = vsyncpa [#allocation4], 0
    %11 = vsyncpa [#allocation7], 0
    %12 = vsyncpa [#allocation5], 0
    // Predicated region
    $region2: #{tpu_custom_call.1} parent=1 // pred_check
      _
    $region3: #{tpu_custom_call.1} parent=1 // pred_check_branch
      %14 = sbr.rel (0) target = $region5
    $region4: #{tpu_custom_call.1} parent=1 // pred_region
      %s16 = ssub.s32 256, 256
      %17 = vsyncadd [#allocation4], %s16
      %s19 = sshll.u32 [#allocation3], 4
      %s20 = int_to_ptr.vmem [resolvable:$true] %s19
      %22 = dma.hbm_to_vmem [thread:$0]  %s0, 256, %s20, [#allocation4]
    $region5: #{tpu_custom_call.1} parent=1 // pred_fallthru
      _
    // Predicated region
    $region6: #{tpu_custom_call.1} parent=1 // pred_check
      _
    $region7: #{tpu_custom_call.1} parent=1 // pred_check_branch
      %24 = sbr.rel (0) target = $region9
    $region8: #{tpu_custom_call.1} parent=1 // pred_region
      %s26 = ssub.s32 1024, 1024
      %27 = vsyncadd [#allocation7], %s26
      %s28 = sshll.u32 [#allocation6], 4
      %s29 = int_to_ptr.vmem [resolvable:$true] %s28
      %34 = dma.hbm_to_vmem [thread:$0]  %s1, 1024, %s29, [#allocation7], 512, 512, 32
    $region9: #{tpu_custom_call.1} parent=1 // pred_fallthru
      _
    // Predicated region
    $region10: #{tpu_custom_call.1} parent=1 // pred_check
      _
    $region11: #{tpu_custom_call.1} parent=1 // pred_check_branch
      %36 = sbr.rel (0) target = $region13
    $region12: #{tpu_custom_call.1} parent=1 // pred_region
      _
    $region13: #{tpu_custom_call.1} parent=1 // pred_fallthru
      _
    // Predicated region
    $region14: #{tpu_custom_call.1} parent=1 // pred_check
      _
    $region15: #{tpu_custom_call.1} parent=1 // pred_check_branch
      %38 = sbr.rel (0) target = $region17
    $region16: #{tpu_custom_call.1} parent=1 // pred_region
      _
    $region17: #{tpu_custom_call.1} parent=1 // pred_fallthru
      _
    // Predicated region
    $region18: #{tpu_custom_call.1} parent=1 // pred_check
      _
    $region19: #{tpu_custom_call.1} parent=1 // pred_check_branch
      %40 = sbr.rel (0) target = $region21
    $region20: #{tpu_custom_call.1} parent=1 // pred_region
      %41 = dma.done [#allocation4], 256
    $region21: #{tpu_custom_call.1} parent=1 // pred_fallthru
      _
    // Predicated region
    $region22: #{tpu_custom_call.1} parent=1 // pred_check
      _
    $region23: #{tpu_custom_call.1} parent=1 // pred_check_branch
      %43 = sbr.rel (0) target = $region25
    $region24: #{tpu_custom_call.1} parent=1 // pred_region
      %44 = dma.done [#allocation7], 1024
    $region25: #{tpu_custom_call.1} parent=1 // pred_fallthru
      _
    %v46 = vld [vmem:[#allocation6] sm:$0xff]
    %v47 = vld [vmem:[#allocation6 + $0x8] sm:$0xff]
    %v48 = vld [vmem:[#allocation6 + $0x10] sm:$0xff]
    %v49 = vld [vmem:[#allocation6 + $0x18] sm:$0xff]
    %v50 = vld [vmem:[#allocation6 + $0x20] sm:$0x1]
    %v51 = vld [vmem:[#allocation6 + $0x28] sm:$0x1]
    %v52 = vld [vmem:[#allocation6 + $0x30] sm:$0x1]
    %v53 = vld [vmem:[#allocation6 + $0x38] sm:$0x1]
    %v54 = vlaneseq
    %v55 = vshrl.u32 %v54, 7
    %v56 = vsub.s32 0, %v55
    %v57 = vrot.slane %v46, %v56
    %v58 = vlaneseq
    %v59 = vshrl.u32 %v58, 7
    %v60 = vsub.s32 0, %v59
    %v61 = vrot.slane %v47, %v60
    %v62 = vlaneseq
    %v63 = vshrl.u32 %v62, 7
    %v64 = vsub.s32 0, %v63
    %v65 = vrot.slane %v48, %v64
    %v66 = vlaneseq
    %v67 = vshrl.u32 %v66, 7
    %v68 = vsub.s32 0, %v67
    %v69 = vrot.slane %v49, %v68
    %v70 = vlaneseq
    %v71 = vshrl.u32 %v70, 7
    %v72 = vsub.s32 1, %v71
    %v73 = vrot.slane %v46, %v72
    %v74 = vlaneseq
    %v75 = vshrl.u32 %v74, 7
    %v76 = vsub.s32 1, %v75
    %v77 = vrot.slane %v47, %v76
    %v78 = vlaneseq
    %v79 = vshrl.u32 %v78, 7
    %v80 = vsub.s32 1, %v79
    %v81 = vrot.slane %v48, %v80
    %v82 = vlaneseq
    %v83 = vshrl.u32 %v82, 7
    %v84 = vsub.s32 1, %v83
    %v85 = vrot.slane %v49, %v84
    %v86 = vlaneseq
    %v87 = vshrl.u32 %v86, 7
    %v88 = vsub.s32 2, %v87
    %v89 = vrot.slane %v46, %v88
    %v90 = vlaneseq
    %v91 = vshrl.u32 %v90, 7
    %v92 = vsub.s32 2, %v91
    %v93 = vrot.slane %v47, %v92
    %v94 = vlaneseq
    %v95 = vshrl.u32 %v94, 7
    %v96 = vsub.s32 2, %v95
    %v97 = vrot.slane %v48, %v96
    %v98 = vlaneseq
    %v99 = vshrl.u32 %v98, 7
    %v100 = vsub.s32 2, %v99
    %v101 = vrot.slane %v49, %v100
    %v102 = vlaneseq
    %v103 = vshrl.u32 %v102, 7
    %v104 = vsub.s32 3, %v103
    %v105 = vrot.slane %v46, %v104
    %v106 = vlaneseq
    %v107 = vshrl.u32 %v106, 7
    %v108 = vsub.s32 3, %v107
    %v109 = vrot.slane %v47, %v108
    %v110 = vlaneseq
    %v111 = vshrl.u32 %v110, 7
    %v112 = vsub.s32 3, %v111
    %v113 = vrot.slane %v48, %v112
    %v114 = vlaneseq
    %v115 = vshrl.u32 %v114, 7
    %v116 = vsub.s32 3, %v115
    %v117 = vrot.slane %v49, %v116
    %v118 = vlaneseq
    %v119 = vshrl.u32 %v118, 7
    %v120 = vsub.s32 4, %v119
    %v121 = vrot.slane %v46, %v120
    %v122 = vlaneseq
    %v123 = vshrl.u32 %v122, 7
    %v124 = vsub.s32 4, %v123
    %v125 = vrot.slane %v47, %v124
    %v126 = vlaneseq
    %v127 = vshrl.u32 %v126, 7
    %v128 = vsub.s32 4, %v127
    %v129 = vrot.slane %v48, %v128
    %v130 = vlaneseq
    %v131 = vshrl.u32 %v130, 7
    %v132 = vsub.s32 4, %v131
    %v133 = vrot.slane %v49, %v132
    %v134 = vlaneseq
    %v135 = vshrl.u32 %v134, 7
    %v136 = vsub.s32 5, %v135
    %v137 = vrot.slane %v46, %v136
    %v138 = vlaneseq
    %v139 = vshrl.u32 %v138, 7
    %v140 = vsub.s32 5, %v139
    %v141 = vrot.slane %v47, %v140
    %v142 = vlaneseq
    %v143 = vshrl.u32 %v142, 7
    %v144 = vsub.s32 5, %v143
    %v145 = vrot.slane %v48, %v144
    %v146 = vlaneseq
    %v147 = vshrl.u32 %v146, 7
    %v148 = vsub.s32 5, %v147
    %v149 = vrot.slane %v49, %v148
    %v150 = vlaneseq
    %v151 = vshrl.u32 %v150, 7
    %v152 = vsub.s32 6, %v151
    %v153 = vrot.slane %v46, %v152
    %v154 = vlaneseq
    %v155 = vshrl.u32 %v154, 7
    %v156 = vsub.s32 6, %v155
    %v157 = vrot.slane %v47, %v156
    %v158 = vlaneseq
    %v159 = vshrl.u32 %v158, 7
    %v160 = vsub.s32 6, %v159
    %v161 = vrot.slane %v48, %v160
    %v162 = vlaneseq
    %v163 = vshrl.u32 %v162, 7
    %v164 = vsub.s32 6, %v163
    %v165 = vrot.slane %v49, %v164
    %v166 = vlaneseq
    %v167 = vshrl.u32 %v166, 7
    %v168 = vsub.s32 7, %v167
    %v169 = vrot.slane %v46, %v168
    %v170 = vlaneseq
    %v171 = vshrl.u32 %v170, 7
    %v172 = vsub.s32 7, %v171
    %v173 = vrot.slane %v47, %v172
    %v174 = vlaneseq
    %v175 = vshrl.u32 %v174, 7
    %v176 = vsub.s32 7, %v175
    %v177 = vrot.slane %v48, %v176
    %v178 = vlaneseq
    %v179 = vshrl.u32 %v178, 7
    %v180 = vsub.s32 7, %v179
    %v181 = vrot.slane %v49, %v180
    %v182 = vlaneseq
    %v183 = vshrl.u32 %v182, 7
    %v184 = vsub.s32 0, %v183
    %v185 = vrot.slane %v50, %v184
    %v186 = vlaneseq
    %v187 = vshrl.u32 %v186, 7
    %v188 = vsub.s32 0, %v187
    %v189 = vrot.slane %v51, %v188
    %v190 = vlaneseq
    %v191 = vshrl.u32 %v190, 7
    %v192 = vsub.s32 0, %v191
    %v193 = vrot.slane %v52, %v192
    %v194 = vlaneseq
    %v195 = vshrl.u32 %v194, 7
    %v196 = vsub.s32 0, %v195
    %v197 = vrot.slane %v53, %v196
    %v198 = vld [vmem:[#allocation3] sm:$0xff]
    %v199 = vld [vmem:[#allocation3 + $0x8] sm:$0xff]
    %v202 = vcombine.high %v198, %v198
    %v203 = vcombine.high %v199, %v199
    %206 = vrot.lane.b32.xlu0 %v198, 16
    %v207 = vpop.permute.xlu0 %206
    %208 = vrot.lane.b32.xlu0 %v202, 16
    %v209 = vpop.permute.xlu0 %208
    %210 = vrot.lane.b32.xlu0 %v199, 16
    %v211 = vpop.permute.xlu0 %210
    %212 = vrot.lane.b32.xlu0 %v203, 16
    %v213 = vpop.permute.xlu0 %212
    %v214 = vlaneseq
    %v215 = vand.u32 %v214, 127
    %vm216 = vcmp.lt.s32.totalorder %v215, 16
    %v217 = vsel %vm216, %v211, %v213
    %v218 = vsel %vm216, %v209, %v211
    %v219 = vsel %vm216, %v207, %v209
    %v220 = vsel %vm216, %v213, %v207
    %221 = vrot.lane.b32.xlu0 %v198, 112
    %v222 = vpop.permute.xlu0 %221
    %223 = vrot.lane.b32.xlu0 %v202, 112
    %v224 = vpop.permute.xlu0 %223
    %225 = vrot.lane.b32.xlu0 %v199, 112
    %v226 = vpop.permute.xlu0 %225
    %227 = vrot.lane.b32.xlu0 %v203, 112
    %v228 = vpop.permute.xlu0 %227
    %vm229 = vcmp.lt.s32.totalorder %v215, 112
    %v230 = vsel %vm229, %v226, %v228
    %v231 = vsel %vm229, %v224, %v226
    %v232 = vsel %vm229, %v222, %v224
    %v233 = vsel %vm229, %v228, %v222
    %234 = vrot.lane.b32.xlu0 %v220, 1
    %v235 = vpop.permute.xlu0 %234
    %236 = vrot.lane.b32.xlu0 %v219, 1
    %v237 = vpop.permute.xlu0 %236
    %238 = vrot.lane.b32.xlu0 %v218, 1
    %v239 = vpop.permute.xlu0 %238
    %240 = vrot.lane.b32.xlu0 %v217, 1
    %v241 = vpop.permute.xlu0 %240
    %vm242 = vcmp.lt.s32.totalorder %v215, 1
    %v243 = vsel %vm242, %v239, %v241
    %v244 = vsel %vm242, %v237, %v239
    %v245 = vsel %vm242, %v235, %v237
    %v246 = vsel %vm242, %v241, %v235
    %v247 = vmul.f32 %v246, %v57
    %v248 = vmul.f32 %v245, %v61
    %v249 = vmul.f32 %v244, %v65
    %v250 = vmul.f32 %v243, %v69
    %v251 = vmul.f32 %v220, %v73
    %v252 = vmul.f32 %v219, %v77
    %v253 = vmul.f32 %v218, %v81
    %v254 = vmul.f32 %v217, %v85
    %255 = vrot.lane.b32.xlu0 %v220, 127
    %v256 = vpop.permute.xlu0 %255
    %257 = vrot.lane.b32.xlu0 %v219, 127
    %v258 = vpop.permute.xlu0 %257
    %259 = vrot.lane.b32.xlu0 %v218, 127
    %v260 = vpop.permute.xlu0 %259
    %261 = vrot.lane.b32.xlu0 %v217, 127
    %v262 = vpop.permute.xlu0 %261
    %vm263 = vcmp.lt.s32.totalorder %v215, 127
    %v264 = vsel %vm263, %v260, %v262
    %v265 = vsel %vm263, %v258, %v260
    %v266 = vsel %vm263, %v256, %v258
    %v267 = vsel %vm263, %v262, %v256
    %v268 = vmul.f32 %v266, %v89
    %v269 = vmul.f32 %v265, %v93
    %v270 = vmul.f32 %v264, %v97
    %v271 = vmul.f32 %v267, %v101
    %272 = vrot.lane.b32.xlu0 %v198, 1
    %v273 = vpop.permute.xlu0 %272
    %274 = vrot.lane.b32.xlu0 %v202, 1
    %v275 = vpop.permute.xlu0 %274
    %276 = vrot.lane.b32.xlu0 %v199, 1
    %v277 = vpop.permute.xlu0 %276
    %278 = vrot.lane.b32.xlu0 %v203, 1
    %v279 = vpop.permute.xlu0 %278
    %v280 = vsel %vm242, %v277, %v279
    %v281 = vsel %vm242, %v275, %v277
    %v282 = vsel %vm242, %v273, %v275
    %v283 = vsel %vm242, %v279, %v273
    %v284 = vmul.f32 %v283, %v105
    %v285 = vmul.f32 %v282, %v109
    %v286 = vmul.f32 %v281, %v113
    %v287 = vmul.f32 %v280, %v117
    %v292 = vcombine.low %v121, %v125
    %v293 = vcombine.low %v129, %v133
    %v296 = vmul.f32 %v198, %v292
    %v297 = vmul.f32 %v199, %v293
    %298 = vrot.lane.b32.xlu0 %v198, 127
    %v299 = vpop.permute.xlu0 %298
    %300 = vrot.lane.b32.xlu0 %v202, 127
    %v301 = vpop.permute.xlu0 %300
    %302 = vrot.lane.b32.xlu0 %v199, 127
    %v303 = vpop.permute.xlu0 %302
    %304 = vrot.lane.b32.xlu0 %v203, 127
    %v305 = vpop.permute.xlu0 %304
    %v306 = vsel %vm263, %v303, %v305
    %v307 = vsel %vm263, %v301, %v303
    %v308 = vsel %vm263, %v299, %v301
    %v309 = vsel %vm263, %v305, %v299
    %v310 = vmul.f32 %v308, %v137
    %v311 = vmul.f32 %v307, %v141
    %v312 = vmul.f32 %v306, %v145
    %v313 = vmul.f32 %v309, %v149
    %314 = vrot.lane.b32.xlu0 %v232, 1
    %v315 = vpop.permute.xlu0 %314
    %316 = vrot.lane.b32.xlu0 %v231, 1
    %v317 = vpop.permute.xlu0 %316
    %318 = vrot.lane.b32.xlu0 %v230, 1
    %v319 = vpop.permute.xlu0 %318
    %320 = vrot.lane.b32.xlu0 %v233, 1
    %v321 = vpop.permute.xlu0 %320
    %v322 = vsel %vm242, %v319, %v321
    %v323 = vsel %vm242, %v317, %v319
    %v324 = vsel %vm242, %v315, %v317
    %v325 = vsel %vm242, %v321, %v315
    %v326 = vmul.f32 %v325, %v153
    %v327 = vmul.f32 %v324, %v157
    %v328 = vmul.f32 %v323, %v161
    %v329 = vmul.f32 %v322, %v165
    %v330 = vmul.f32 %v232, %v169
    %v331 = vmul.f32 %v231, %v173
    %v332 = vmul.f32 %v230, %v177
    %v333 = vmul.f32 %v233, %v181
    %334 = vrot.lane.b32.xlu0 %v232, 127
    %v335 = vpop.permute.xlu0 %334
    %336 = vrot.lane.b32.xlu0 %v231, 127
    %v337 = vpop.permute.xlu0 %336
    %338 = vrot.lane.b32.xlu0 %v230, 127
    %v339 = vpop.permute.xlu0 %338
    %340 = vrot.lane.b32.xlu0 %v233, 127
    %v341 = vpop.permute.xlu0 %340
    %v342 = vsel %vm263, %v339, %v341
    %v343 = vsel %vm263, %v337, %v339
    %v344 = vsel %vm263, %v335, %v337
    %v345 = vsel %vm263, %v341, %v335
    %v346 = vmul.f32 %v344, %v185
    %v347 = vmul.f32 %v343, %v189
    %v348 = vmul.f32 %v342, %v193
    %v349 = vmul.f32 %v345, %v197
    %v354 = vrot.slane %v251, 4
    %v355 = vrot.slane %v252, 4
    %v356 = vrot.slane %v253, 4
    %v357 = vrot.slane %v254, 4
    %v366 = vrot.slane %v284, 4
    %v367 = vrot.slane %v285, 4
    %v368 = vrot.slane %v286, 4
    %v369 = vrot.slane %v287, 4
    %v376 = vcombine.high %v296, %v296
    %v377 = vcombine.high %v297, %v297
    %v384 = vrot.slane %v310, 4
    %v385 = vrot.slane %v311, 4
    %v386 = vrot.slane %v312, 4
    %v387 = vrot.slane %v313, 4
    %v396 = vrot.slane %v330, 4
    %v397 = vrot.slane %v331, 4
    %v398 = vrot.slane %v332, 4
    %v399 = vrot.slane %v333, 4
    %vm404 = vcmask 1043456
    %v405 = vsel %vm404, %v247, %v354
    %v406 = vsel %vm404, %v248, %v355
    %v407 = vsel %vm404, %v249, %v356
    %v408 = vsel %vm404, %v250, %v357
    %v409 = vsel %vm404, %v268, %v366
    %v410 = vsel %vm404, %v269, %v367
    %v411 = vsel %vm404, %v270, %v368
    %v412 = vsel %vm404, %v271, %v369
    %v413 = vsel %vm404, %v296, %v384
    %v414 = vsel %vm404, %v376, %v385
    %v415 = vsel %vm404, %v297, %v386
    %v416 = vsel %vm404, %v377, %v387
    %v417 = vsel %vm404, %v326, %v396
    %v418 = vsel %vm404, %v327, %v397
    %v419 = vsel %vm404, %v328, %v398
    %v420 = vsel %vm404, %v329, %v399
    %v421 = vld [vmem:[%s2] sm:$0x3]
    %v422 = vpack.c.bf16 %v409, %v405
    %v423 = vpack.c.bf16 %v410, %v406
    %v424 = vpack.c.bf16 %v411, %v407
    %v425 = vpack.c.bf16 %v412, %v408
    %v426 = vpack.c.bf16 %v417, %v413
    %v427 = vpack.c.bf16 %v418, %v414
    %v428 = vpack.c.bf16 %v419, %v415
    %v429 = vpack.c.bf16 %v420, %v416
    %v430 = vpack.c.bf16 %v346, %v346
    %v431 = vpack.c.bf16 %v347, %v347
    %v432 = vpack.c.bf16 %v348, %v348
    %v433 = vpack.c.bf16 %v349, %v349
    %vm434 = vcmask 293888
    %v436 = vsel %vm434, %v421, 0
    %vm438 = vcmask 1041408
    %v440 = vsel %vm438, %v430, 0
    %v443 = vsel %vm438, %v431, 0
    %v446 = vsel %vm438, %v432, 0
    %v449 = vsel %vm438, %v433, 0
    %451 = vmatprep.subr.bf16.mxu0 %v423
    %452 = vmatpush1.bf16.msra.mxu0 %v422
    %453 = vmatprep.subr.bf16.mxu0 %v427
    %454 = vmatpush1.bf16.msra.mxu0 %v426
    %455 = vmatprep.subr.bf16.mxu0 %v443
    %456 = vmatpush1.bf16.msra.mxu0 %v440
    %457 = vmatprep.subr.bf16.mxu0 0
    %458 = vmatpush1.bf16.msra.mxu0 0
    %459 = vmatprep.subr.bf16.mxu0 0
    %460 = vmatpush1.bf16.msra.mxu0 0
    %461 = vmatprep.subr.bf16.mxu0 0
    %462 = vmatpush1.bf16.msra.mxu0 0
    %463 = vmatprep.subr.bf16.mxu0 0
    %464 = vmatpush1.bf16.msra.mxu0 0
    %465 = vmatprep.subr.bf16.mxu0 0
    %466 = vmatpush1.bf16.msra.mxu0 0
    %467 = vmatprep.subr.bf16.mxu0 0
    %468 = vmatpush1.bf16.msra.mxu0 0
    %469 = vmatprep.subr.bf16.mxu0 0
    %470 = vmatpush1.bf16.msra.mxu0 0
    %471 = vmatprep.subr.bf16.mxu0 0
    %472 = vmatpush1.bf16.msra.mxu0 0
    %473 = vmatprep.subr.bf16.mxu0 0
    %474 = vmatpush1.bf16.msra.mxu0 0
    %475 = vmatprep.subr.bf16.mxu0 0
    %476 = vmatpush1.bf16.msra.mxu0 0
    %477 = vmatprep.subr.bf16.mxu0 0
    %478 = vmatpush1.bf16.msra.mxu0 0
    %479 = vmatprep.subr.bf16.mxu0 0
    %480 = vmatpush1.bf16.msra.mxu0 0
    %481 = vmatprep.subr.bf16.mxu0 0
    %482 = vmatpush1.bf16.msra.mxu0 0
    %483 = vmatprep.mubr.bf16.mxu0 0
    %484 = vmatmul.mubr.bf16.gmra.mrb[0].mxu0 %v436
    %v485 = vpop.f32.mrb[0].mxu0
    %v486 = vadd.f32 0.0, %v485
    %v487 = vpop.f32.mrb[0].mxu0
    %v488 = vadd.f32 0.0, %v487
    %v489 = vpop.f32.mrb[0].mxu0
    %v490 = vpop.f32.mrb[0].mxu0
    %491 = vdwg.mxu0
    %492 = vmatprep.subr.bf16.mxu0 %v425
    %493 = vmatpush1.bf16.msra.mxu0 %v424
    %494 = vmatprep.subr.bf16.mxu0 %v429
    %495 = vmatpush1.bf16.msra.mxu0 %v428
    %496 = vmatprep.subr.bf16.mxu0 %v449
    %497 = vmatpush1.bf16.msra.mxu0 %v446
    %498 = vmatprep.subr.bf16.mxu0 0
    %499 = vmatpush1.bf16.msra.mxu0 0
    %500 = vmatprep.subr.bf16.mxu0 0
    %501 = vmatpush1.bf16.msra.mxu0 0
    %502 = vmatprep.subr.bf16.mxu0 0
    %503 = vmatpush1.bf16.msra.mxu0 0
    %504 = vmatprep.subr.bf16.mxu0 0
    %505 = vmatpush1.bf16.msra.mxu0 0
    %506 = vmatprep.subr.bf16.mxu0 0
    %507 = vmatpush1.bf16.msra.mxu0 0
    %508 = vmatprep.subr.bf16.mxu0 0
    %509 = vmatpush1.bf16.msra.mxu0 0
    %510 = vmatprep.subr.bf16.mxu0 0
    %511 = vmatpush1.bf16.msra.mxu0 0
    %512 = vmatprep.subr.bf16.mxu0 0
    %513 = vmatpush1.bf16.msra.mxu0 0
    %514 = vmatprep.subr.bf16.mxu0 0
    %515 = vmatpush1.bf16.msra.mxu0 0
    %516 = vmatprep.subr.bf16.mxu0 0
    %517 = vmatpush1.bf16.msra.mxu0 0
    %518 = vmatprep.subr.bf16.mxu0 0
    %519 = vmatpush1.bf16.msra.mxu0 0
    %520 = vmatprep.subr.bf16.mxu0 0
    %521 = vmatpush1.bf16.msra.mxu0 0
    %522 = vmatprep.subr.bf16.mxu0 0
    %523 = vmatpush1.bf16.msra.mxu0 0
    %524 = vmatprep.mubr.bf16.mxu0 0
    %525 = vmatmul.mubr.bf16.gmra.mrb[0].mxu0 %v436
    %v526 = vpop.f32.mrb[0].mxu0
    %v527 = vadd.f32 0.0, %v526
    %v528 = vpop.f32.mrb[0].mxu0
    %v529 = vadd.f32 0.0, %v528
    %v530 = vpop.f32.mrb[0].mxu0
    %v531 = vpop.f32.mrb[0].mxu0
    %532 = vdwg.mxu0
    %v533 = vmax.f32 %v486, 0.0
    %v534 = vmax.f32 %v488, 0.0
    %v535 = vmax.f32 %v527, 0.0
    %v536 = vmax.f32 %v529, 0.0
    %537 = vrot.lane.b32.xlu0 %v533, 16
    %v538 = vpop.permute.xlu0 %537
    %539 = vrot.lane.b32.xlu0 %v534, 16
    %v540 = vpop.permute.xlu0 %539
    %541 = vrot.lane.b32.xlu0 %v535, 16
    %v542 = vpop.permute.xlu0 %541
    %543 = vrot.lane.b32.xlu0 %v536, 16
    %v544 = vpop.permute.xlu0 %543
    %v545 = vsel %vm216, %v542, %v544
    %v546 = vsel %vm216, %v540, %v542
    %v547 = vsel %vm216, %v538, %v540
    %v548 = vsel %vm216, %v544, %v538
    %549 = vrot.lane.b32.xlu0 %v533, 112
    %v550 = vpop.permute.xlu0 %549
    %551 = vrot.lane.b32.xlu0 %v534, 112
    %v552 = vpop.permute.xlu0 %551
    %553 = vrot.lane.b32.xlu0 %v535, 112
    %v554 = vpop.permute.xlu0 %553
    %555 = vrot.lane.b32.xlu0 %v536, 112
    %v556 = vpop.permute.xlu0 %555
    %v557 = vsel %vm229, %v554, %v556
    %v558 = vsel %vm229, %v552, %v554
    %v559 = vsel %vm229, %v550, %v552
    %v560 = vsel %vm229, %v556, %v550
    %561 = vrot.lane.b32.xlu0 %v548, 1
    %v562 = vpop.permute.xlu0 %561
    %563 = vrot.lane.b32.xlu0 %v547, 1
    %v564 = vpop.permute.xlu0 %563
    %565 = vrot.lane.b32.xlu0 %v546, 1
    %v566 = vpop.permute.xlu0 %565
    %567 = vrot.lane.b32.xlu0 %v545, 1
    %v568 = vpop.permute.xlu0 %567
    %v569 = vsel %vm242, %v566, %v568
    %v570 = vsel %vm242, %v564, %v566
    %v571 = vsel %vm242, %v562, %v564
    %v572 = vsel %vm242, %v568, %v562
    %v573 = vmul.f32 %v572, %v57
    %v574 = vmul.f32 %v571, %v61
    %v575 = vmul.f32 %v570, %v65
    %v576 = vmul.f32 %v569, %v69
    %v577 = vmul.f32 %v548, %v73
    %v578 = vmul.f32 %v547, %v77
    %v579 = vmul.f32 %v546, %v81
    %v580 = vmul.f32 %v545, %v85
    %581 = vrot.lane.b32.xlu0 %v548, 127
    %v582 = vpop.permute.xlu0 %581
    %583 = vrot.lane.b32.xlu0 %v547, 127
    %v584 = vpop.permute.xlu0 %583
    %585 = vrot.lane.b32.xlu0 %v546, 127
    %v586 = vpop.permute.xlu0 %585
    %587 = vrot.lane.b32.xlu0 %v545, 127
    %v588 = vpop.permute.xlu0 %587
    %v589 = vsel %vm263, %v586, %v588
    %v590 = vsel %vm263, %v584, %v586
    %v591 = vsel %vm263, %v582, %v584
    %v592 = vsel %vm263, %v588, %v582
    %v593 = vmul.f32 %v591, %v89
    %v594 = vmul.f32 %v590, %v93
    %v595 = vmul.f32 %v589, %v97
    %v596 = vmul.f32 %v592, %v101
    %597 = vrot.lane.b32.xlu0 %v533, 1
    %v598 = vpop.permute.xlu0 %597
    %599 = vrot.lane.b32.xlu0 %v534, 1
    %v600 = vpop.permute.xlu0 %599
    %601 = vrot.lane.b32.xlu0 %v535, 1
    %v602 = vpop.permute.xlu0 %601
    %603 = vrot.lane.b32.xlu0 %v536, 1
    %v604 = vpop.permute.xlu0 %603
    %v605 = vsel %vm242, %v602, %v604
    %v606 = vsel %vm242, %v600, %v602
    %v607 = vsel %vm242, %v598, %v600
    %v608 = vsel %vm242, %v604, %v598
    %v609 = vmul.f32 %v608, %v105
    %v610 = vmul.f32 %v607, %v109
    %v611 = vmul.f32 %v606, %v113
    %v612 = vmul.f32 %v605, %v117
    %v613 = vmul.f32 %v533, %v121
    %v614 = vmul.f32 %v534, %v125
    %v615 = vmul.f32 %v535, %v129
    %v616 = vmul.f32 %v536, %v133
    %617 = vrot.lane.b32.xlu0 %v533, 127
    %v618 = vpop.permute.xlu0 %617
    %619 = vrot.lane.b32.xlu0 %v534, 127
    %v620 = vpop.permute.xlu0 %619
    %621 = vrot.lane.b32.xlu0 %v535, 127
    %v622 = vpop.permute.xlu0 %621
    %623 = vrot.lane.b32.xlu0 %v536, 127
    %v624 = vpop.permute.xlu0 %623
    %v625 = vsel %vm263, %v622, %v624
    %v626 = vsel %vm263, %v620, %v622
    %v627 = vsel %vm263, %v618, %v620
    %v628 = vsel %vm263, %v624, %v618
    %v629 = vmul.f32 %v627, %v137
    %v630 = vmul.f32 %v626, %v141
    %v631 = vmul.f32 %v625, %v145
    %v632 = vmul.f32 %v628, %v149
    %633 = vrot.lane.b32.xlu0 %v559, 1
    %v634 = vpop.permute.xlu0 %633
    %635 = vrot.lane.b32.xlu0 %v558, 1
    %v636 = vpop.permute.xlu0 %635
    %637 = vrot.lane.b32.xlu0 %v557, 1
    %v638 = vpop.permute.xlu0 %637
    %639 = vrot.lane.b32.xlu0 %v560, 1
    %v640 = vpop.permute.xlu0 %639
    %v641 = vsel %vm242, %v638, %v640
    %v642 = vsel %vm242, %v636, %v638
    %v643 = vsel %vm242, %v634, %v636
    %v644 = vsel %vm242, %v640, %v634
    %v645 = vmul.f32 %v644, %v153
    %v646 = vmul.f32 %v643, %v157
    %v647 = vmul.f32 %v642, %v161
    %v648 = vmul.f32 %v641, %v165
    %v649 = vmul.f32 %v559, %v169
    %v650 = vmul.f32 %v558, %v173
    %v651 = vmul.f32 %v557, %v177
    %v652 = vmul.f32 %v560, %v181
    %653 = vrot.lane.b32.xlu0 %v559, 127
    %v654 = vpop.permute.xlu0 %653
    %655 = vrot.lane.b32.xlu0 %v558, 127
    %v656 = vpop.permute.xlu0 %655
    %657 = vrot.lane.b32.xlu0 %v557, 127
    %v658 = vpop.permute.xlu0 %657
    %659 = vrot.lane.b32.xlu0 %v560, 127
    %v660 = vpop.permute.xlu0 %659
    %v661 = vsel %vm263, %v658, %v660
    %v662 = vsel %vm263, %v656, %v658
    %v663 = vsel %vm263, %v654, %v656
    %v664 = vsel %vm263, %v660, %v654
    %v665 = vmul.f32 %v663, %v185
    %v666 = vmul.f32 %v662, %v189
    %v667 = vmul.f32 %v661, %v193
    %v668 = vmul.f32 %v664, %v197
    %v673 = vrot.slane %v577, 4
    %v674 = vrot.slane %v578, 4
    %v675 = vrot.slane %v579, 4
    %v676 = vrot.slane %v580, 4
    %v685 = vrot.slane %v609, 4
    %v686 = vrot.slane %v610, 4
    %v687 = vrot.slane %v611, 4
    %v688 = vrot.slane %v612, 4
    %v697 = vrot.slane %v629, 4
    %v698 = vrot.slane %v630, 4
    %v699 = vrot.slane %v631, 4
    %v700 = vrot.slane %v632, 4
    %v709 = vrot.slane %v649, 4
    %v710 = vrot.slane %v650, 4
    %v711 = vrot.slane %v651, 4
    %v712 = vrot.slane %v652, 4
    %v717 = vsel %vm404, %v573, %v673
    %v718 = vsel %vm404, %v574, %v674
    %v719 = vsel %vm404, %v575, %v675
    %v720 = vsel %vm404, %v576, %v676
    %v721 = vsel %vm404, %v593, %v685
    %v722 = vsel %vm404, %v594, %v686
    %v723 = vsel %vm404, %v595, %v687
    %v724 = vsel %vm404, %v596, %v688
    %v725 = vsel %vm404, %v613, %v697
    %v726 = vsel %vm404, %v614, %v698
    %v727 = vsel %vm404, %v615, %v699
    %v728 = vsel %vm404, %v616, %v700
    %v729 = vsel %vm404, %v645, %v709
    %v730 = vsel %vm404, %v646, %v710
    %v731 = vsel %vm404, %v647, %v711
    %v732 = vsel %vm404, %v648, %v712
    %s733 = scalar_lea.vmem %s2, 2
    %v734 = vld [vmem:[%s733] sm:$0x3]
    %v735 = vpack.c.bf16 %v721, %v717
    %v736 = vpack.c.bf16 %v722, %v718
    %v737 = vpack.c.bf16 %v723, %v719
    %v738 = vpack.c.bf16 %v724, %v720
    %v739 = vpack.c.bf16 %v729, %v725
    %v740 = vpack.c.bf16 %v730, %v726
    %v741 = vpack.c.bf16 %v731, %v727
    %v742 = vpack.c.bf16 %v732, %v728
    %v743 = vpack.c.bf16 %v665, %v665
    %v744 = vpack.c.bf16 %v666, %v666
    %v745 = vpack.c.bf16 %v667, %v667
    %v746 = vpack.c.bf16 %v668, %v668
    %v748 = vsel %vm434, %v734, 0
    %v751 = vsel %vm438, %v743, 0
    %v754 = vsel %vm438, %v744, 0
    %v757 = vsel %vm438, %v745, 0
    %v760 = vsel %vm438, %v746, 0
    %762 = vmatprep.subr.bf16.mxu0 %v736
    %763 = vmatpush1.bf16.msra.mxu0 %v735
    %764 = vmatprep.subr.bf16.mxu0 %v740
    %765 = vmatpush1.bf16.msra.mxu0 %v739
    %766 = vmatprep.subr.bf16.mxu0 %v754
    %767 = vmatpush1.bf16.msra.mxu0 %v751
    %768 = vmatprep.subr.bf16.mxu0 0
    %769 = vmatpush1.bf16.msra.mxu0 0
    %770 = vmatprep.subr.bf16.mxu0 0
    %771 = vmatpush1.bf16.msra.mxu0 0
    %772 = vmatprep.subr.bf16.mxu0 0
    %773 = vmatpush1.bf16.msra.mxu0 0
    %774 = vmatprep.subr.bf16.mxu0 0
    %775 = vmatpush1.bf16.msra.mxu0 0
    %776 = vmatprep.subr.bf16.mxu0 0
    %777 = vmatpush1.bf16.msra.mxu0 0
    %778 = vmatprep.subr.bf16.mxu0 0
    %779 = vmatpush1.bf16.msra.mxu0 0
    %780 = vmatprep.subr.bf16.mxu0 0
    %781 = vmatpush1.bf16.msra.mxu0 0
    %782 = vmatprep.subr.bf16.mxu0 0
    %783 = vmatpush1.bf16.msra.mxu0 0
    %784 = vmatprep.subr.bf16.mxu0 0
    %785 = vmatpush1.bf16.msra.mxu0 0
    %786 = vmatprep.subr.bf16.mxu0 0
    %787 = vmatpush1.bf16.msra.mxu0 0
    %788 = vmatprep.subr.bf16.mxu0 0
    %789 = vmatpush1.bf16.msra.mxu0 0
    %790 = vmatprep.subr.bf16.mxu0 0
    %791 = vmatpush1.bf16.msra.mxu0 0
    %792 = vmatprep.subr.bf16.mxu0 0
    %793 = vmatpush1.bf16.msra.mxu0 0
    %794 = vmatprep.mubr.bf16.mxu0 0
    %795 = vmatmul.mubr.bf16.gmra.mrb[0].mxu0 %v748
    %v796 = vpop.f32.mrb[0].mxu0
    %v797 = vadd.f32 %v198, %v796
    %v798 = vpop.f32.mrb[0].mxu0
    %v799 = vadd.f32 %v202, %v798
    %v800 = vpop.f32.mrb[0].mxu0
    %v801 = vpop.f32.mrb[0].mxu0
    %802 = vdwg.mxu0
    %803 = vmatprep.subr.bf16.mxu0 %v738
    %804 = vmatpush1.bf16.msra.mxu0 %v737
    %805 = vmatprep.subr.bf16.mxu0 %v742
    %806 = vmatpush1.bf16.msra.mxu0 %v741
    %807 = vmatprep.subr.bf16.mxu0 %v760
    %808 = vmatpush1.bf16.msra.mxu0 %v757
    %809 = vmatprep.subr.bf16.mxu0 0
    %810 = vmatpush1.bf16.msra.mxu0 0
    %811 = vmatprep.subr.bf16.mxu0 0
    %812 = vmatpush1.bf16.msra.mxu0 0
    %813 = vmatprep.subr.bf16.mxu0 0
    %814 = vmatpush1.bf16.msra.mxu0 0
    %815 = vmatprep.subr.bf16.mxu0 0
    %816 = vmatpush1.bf16.msra.mxu0 0
    %817 = vmatprep.subr.bf16.mxu0 0
    %818 = vmatpush1.bf16.msra.mxu0 0
    %819 = vmatprep.subr.bf16.mxu0 0
    %820 = vmatpush1.bf16.msra.mxu0 0
    %821 = vmatprep.subr.bf16.mxu0 0
    %822 = vmatpush1.bf16.msra.mxu0 0
    %823 = vmatprep.subr.bf16.mxu0 0
    %824 = vmatpush1.bf16.msra.mxu0 0
    %825 = vmatprep.subr.bf16.mxu0 0
    %826 = vmatpush1.bf16.msra.mxu0 0
    %827 = vmatprep.subr.bf16.mxu0 0
    %828 = vmatpush1.bf16.msra.mxu0 0
    %829 = vmatprep.subr.bf16.mxu0 0
    %830 = vmatpush1.bf16.msra.mxu0 0
    %831 = vmatprep.subr.bf16.mxu0 0
    %832 = vmatpush1.bf16.msra.mxu0 0
    %833 = vmatprep.subr.bf16.mxu0 0
    %834 = vmatpush1.bf16.msra.mxu0 0
    %835 = vmatprep.mubr.bf16.mxu0 0
    %836 = vmatmul.mubr.bf16.gmra.mrb[0].mxu0 %v748
    %v837 = vpop.f32.mrb[0].mxu0
    %v838 = vadd.f32 %v199, %v837
    %v839 = vpop.f32.mrb[0].mxu0
    %v840 = vadd.f32 %v203, %v839
    %v841 = vpop.f32.mrb[0].mxu0
    %v842 = vpop.f32.mrb[0].mxu0
    %843 = vdwg.mxu0
    %v844 = vmax.f32 %v797, 0.0
    %v845 = vmax.f32 %v799, 0.0
    %v846 = vmax.f32 %v838, 0.0
    %v847 = vmax.f32 %v840, 0.0
    %848 = vrot.lane.b32.xlu0 %v844, 16
    %v849 = vpop.permute.xlu0 %848
    %850 = vrot.lane.b32.xlu0 %v845, 16
    %v851 = vpop.permute.xlu0 %850
    %852 = vrot.lane.b32.xlu0 %v846, 16
    %v853 = vpop.permute.xlu0 %852
    %854 = vrot.lane.b32.xlu0 %v847, 16
    %v855 = vpop.permute.xlu0 %854
    %v856 = vsel %vm216, %v853, %v855
    %v857 = vsel %vm216, %v851, %v853
    %v858 = vsel %vm216, %v849, %v851
    %v859 = vsel %vm216, %v855, %v849
    %860 = vrot.lane.b32.xlu0 %v844, 112
    %v861 = vpop.permute.xlu0 %860
    %862 = vrot.lane.b32.xlu0 %v845, 112
    %v863 = vpop.permute.xlu0 %862
    %864 = vrot.lane.b32.xlu0 %v846, 112
    %v865 = vpop.permute.xlu0 %864
    %866 = vrot.lane.b32.xlu0 %v847, 112
    %v867 = vpop.permute.xlu0 %866
    %v868 = vsel %vm229, %v865, %v867
    %v869 = vsel %vm229, %v863, %v865
    %v870 = vsel %vm229, %v861, %v863
    %v871 = vsel %vm229, %v867, %v861
    %872 = vrot.lane.b32.xlu0 %v859, 1
    %v873 = vpop.permute.xlu0 %872
    %874 = vrot.lane.b32.xlu0 %v858, 1
    %v875 = vpop.permute.xlu0 %874
    %876 = vrot.lane.b32.xlu0 %v857, 1
    %v877 = vpop.permute.xlu0 %876
    %878 = vrot.lane.b32.xlu0 %v856, 1
    %v879 = vpop.permute.xlu0 %878
    %v880 = vsel %vm242, %v877, %v879
    %v881 = vsel %vm242, %v875, %v877
    %v882 = vsel %vm242, %v873, %v875
    %v883 = vsel %vm242, %v879, %v873
    %v884 = vmul.f32 %v883, %v57
    %v885 = vmul.f32 %v882, %v61
    %v886 = vmul.f32 %v881, %v65
    %v887 = vmul.f32 %v880, %v69
    %v888 = vmul.f32 %v859, %v73
    %v889 = vmul.f32 %v858, %v77
    %v890 = vmul.f32 %v857, %v81
    %v891 = vmul.f32 %v856, %v85
    %892 = vrot.lane.b32.xlu0 %v859, 127
    %v893 = vpop.permute.xlu0 %892
    %894 = vrot.lane.b32.xlu0 %v858, 127
    %v895 = vpop.permute.xlu0 %894
    %896 = vrot.lane.b32.xlu0 %v857, 127
    %v897 = vpop.permute.xlu0 %896
    %898 = vrot.lane.b32.xlu0 %v856, 127
    %v899 = vpop.permute.xlu0 %898
    %v900 = vsel %vm263, %v897, %v899
    %v901 = vsel %vm263, %v895, %v897
    %v902 = vsel %vm263, %v893, %v895
    %v903 = vsel %vm263, %v899, %v893
    %v904 = vmul.f32 %v902, %v89
    %v905 = vmul.f32 %v901, %v93
    %v906 = vmul.f32 %v900, %v97
    %v907 = vmul.f32 %v903, %v101
    %908 = vrot.lane.b32.xlu0 %v844, 1
    %v909 = vpop.permute.xlu0 %908
    %910 = vrot.lane.b32.xlu0 %v845, 1
    %v911 = vpop.permute.xlu0 %910
    %912 = vrot.lane.b32.xlu0 %v846, 1
    %v913 = vpop.permute.xlu0 %912
    %914 = vrot.lane.b32.xlu0 %v847, 1
    %v915 = vpop.permute.xlu0 %914
    %v916 = vsel %vm242, %v913, %v915
    %v917 = vsel %vm242, %v911, %v913
    %v918 = vsel %vm242, %v909, %v911
    %v919 = vsel %vm242, %v915, %v909
    %v920 = vmul.f32 %v919, %v105
    %v921 = vmul.f32 %v918, %v109
    %v922 = vmul.f32 %v917, %v113
    %v923 = vmul.f32 %v916, %v117
    %v924 = vmul.f32 %v844, %v121
    %v925 = vmul.f32 %v845, %v125
    %v926 = vmul.f32 %v846, %v129
    %v927 = vmul.f32 %v847, %v133
    %928 = vrot.lane.b32.xlu0 %v844, 127
    %v929 = vpop.permute.xlu0 %928
    %930 = vrot.lane.b32.xlu0 %v845, 127
    %v931 = vpop.permute.xlu0 %930
    %932 = vrot.lane.b32.xlu0 %v846, 127
    %v933 = vpop.permute.xlu0 %932
    %934 = vrot.lane.b32.xlu0 %v847, 127
    %v935 = vpop.permute.xlu0 %934
    %v936 = vsel %vm263, %v933, %v935
    %v937 = vsel %vm263, %v931, %v933
    %v938 = vsel %vm263, %v929, %v931
    %v939 = vsel %vm263, %v935, %v929
    %v940 = vmul.f32 %v938, %v137
    %v941 = vmul.f32 %v937, %v141
    %v942 = vmul.f32 %v936, %v145
    %v943 = vmul.f32 %v939, %v149
    %944 = vrot.lane.b32.xlu0 %v870, 1
    %v945 = vpop.permute.xlu0 %944
    %946 = vrot.lane.b32.xlu0 %v869, 1
    %v947 = vpop.permute.xlu0 %946
    %948 = vrot.lane.b32.xlu0 %v868, 1
    %v949 = vpop.permute.xlu0 %948
    %950 = vrot.lane.b32.xlu0 %v871, 1
    %v951 = vpop.permute.xlu0 %950
    %v952 = vsel %vm242, %v949, %v951
    %v953 = vsel %vm242, %v947, %v949
    %v954 = vsel %vm242, %v945, %v947
    %v955 = vsel %vm242, %v951, %v945
    %v956 = vmul.f32 %v955, %v153
    %v957 = vmul.f32 %v954, %v157
    %v958 = vmul.f32 %v953, %v161
    %v959 = vmul.f32 %v952, %v165
    %v960 = vmul.f32 %v870, %v169
    %v961 = vmul.f32 %v869, %v173
    %v962 = vmul.f32 %v868, %v177
    %v963 = vmul.f32 %v871, %v181
    %964 = vrot.lane.b32.xlu0 %v870, 127
    %v965 = vpop.permute.xlu0 %964
    %966 = vrot.lane.b32.xlu0 %v869, 127
    %v967 = vpop.permute.xlu0 %966
    %968 = vrot.lane.b32.xlu0 %v868, 127
    %v969 = vpop.permute.xlu0 %968
    %970 = vrot.lane.b32.xlu0 %v871, 127
    %v971 = vpop.permute.xlu0 %970
    %v972 = vsel %vm263, %v969, %v971
    %v973 = vsel %vm263, %v967, %v969
    %v974 = vsel %vm263, %v965, %v967
    %v975 = vsel %vm263, %v971, %v965
    %v976 = vmul.f32 %v974, %v185
    %v977 = vmul.f32 %v973, %v189
    %v978 = vmul.f32 %v972, %v193
    %v979 = vmul.f32 %v975, %v197
    %v984 = vrot.slane %v888, 4
    %v985 = vrot.slane %v889, 4
    %v986 = vrot.slane %v890, 4
    %v987 = vrot.slane %v891, 4
    %v996 = vrot.slane %v920, 4
    %v997 = vrot.slane %v921, 4
    %v998 = vrot.slane %v922, 4
    %v999 = vrot.slane %v923, 4
    %v1008 = vrot.slane %v940, 4
    %v1009 = vrot.slane %v941, 4
    %v1010 = vrot.slane %v942, 4
    %v1011 = vrot.slane %v943, 4
    %v1020 = vrot.slane %v960, 4
    %v1021 = vrot.slane %v961, 4
    %v1022 = vrot.slane %v962, 4
    %v1023 = vrot.slane %v963, 4
    %v1028 = vsel %vm404, %v884, %v984
    %v1029 = vsel %vm404, %v885, %v985
    %v1030 = vsel %vm404, %v886, %v986
    %v1031 = vsel %vm404, %v887, %v987
    %v1032 = vsel %vm404, %v904, %v996
    %v1033 = vsel %vm404, %v905, %v997
    %v1034 = vsel %vm404, %v906, %v998
    %v1035 = vsel %vm404, %v907, %v999
    %v1036 = vsel %vm404, %v924, %v1008
    %v1037 = vsel %vm404, %v925, %v1009
    %v1038 = vsel %vm404, %v926, %v1010
    %v1039 = vsel %vm404, %v927, %v1011
    %v1040 = vsel %vm404, %v956, %v1020
    %v1041 = vsel %vm404, %v957, %v1021
    %v1042 = vsel %vm404, %v958, %v1022
    %v1043 = vsel %vm404, %v959, %v1023
    %s1044 = scalar_lea.vmem %s2, 4
    %v1045 = vld [vmem:[%s1044] sm:$0x3]
    %v1046 = vpack.c.bf16 %v1032, %v1028
    %v1047 = vpack.c.bf16 %v1033, %v1029
    %v1048 = vpack.c.bf16 %v1034, %v1030
    %v1049 = vpack.c.bf16 %v1035, %v1031
    %v1050 = vpack.c.bf16 %v1040, %v1036
    %v1051 = vpack.c.bf16 %v1041, %v1037
    %v1052 = vpack.c.bf16 %v1042, %v1038
    %v1053 = vpack.c.bf16 %v1043, %v1039
    %v1054 = vpack.c.bf16 %v976, %v976
    %v1055 = vpack.c.bf16 %v977, %v977
    %v1056 = vpack.c.bf16 %v978, %v978
    %v1057 = vpack.c.bf16 %v979, %v979
    %v1059 = vsel %vm434, %v1045, 0
    %v1062 = vsel %vm438, %v1054, 0
    %v1065 = vsel %vm438, %v1055, 0
    %v1068 = vsel %vm438, %v1056, 0
    %v1071 = vsel %vm438, %v1057, 0
    %1073 = vmatprep.subr.bf16.mxu0 %v1047
    %1074 = vmatpush1.bf16.msra.mxu0 %v1046
    %1075 = vmatprep.subr.bf16.mxu0 %v1051
    %1076 = vmatpush1.bf16.msra.mxu0 %v1050
    %1077 = vmatprep.subr.bf16.mxu0 %v1065
    %1078 = vmatpush1.bf16.msra.mxu0 %v1062
    %1079 = vmatprep.subr.bf16.mxu0 0
    %1080 = vmatpush1.bf16.msra.mxu0 0
    %1081 = vmatprep.subr.bf16.mxu0 0
    %1082 = vmatpush1.bf16.msra.mxu0 0
    %1083 = vmatprep.subr.bf16.mxu0 0
    %1084 = vmatpush1.bf16.msra.mxu0 0
    %1085 = vmatprep.subr.bf16.mxu0 0
    %1086 = vmatpush1.bf16.msra.mxu0 0
    %1087 = vmatprep.subr.bf16.mxu0 0
    %1088 = vmatpush1.bf16.msra.mxu0 0
    %1089 = vmatprep.subr.bf16.mxu0 0
    %1090 = vmatpush1.bf16.msra.mxu0 0
    %1091 = vmatprep.subr.bf16.mxu0 0
    %1092 = vmatpush1.bf16.msra.mxu0 0
    %1093 = vmatprep.subr.bf16.mxu0 0
    %1094 = vmatpush1.bf16.msra.mxu0 0
    %1095 = vmatprep.subr.bf16.mxu0 0
    %1096 = vmatpush1.bf16.msra.mxu0 0
    %1097 = vmatprep.subr.bf16.mxu0 0
    %1098 = vmatpush1.bf16.msra.mxu0 0
    %1099 = vmatprep.subr.bf16.mxu0 0
    %1100 = vmatpush1.bf16.msra.mxu0 0
    %1101 = vmatprep.subr.bf16.mxu0 0
    %1102 = vmatpush1.bf16.msra.mxu0 0
    %1103 = vmatprep.subr.bf16.mxu0 0
    %1104 = vmatpush1.bf16.msra.mxu0 0
    %1105 = vmatprep.mubr.bf16.mxu0 0
    %1106 = vmatmul.mubr.bf16.gmra.mrb[0].mxu0 %v1059
    %v1107 = vpop.f32.mrb[0].mxu0
    %v1108 = vadd.f32 0.0, %v1107
    %v1109 = vpop.f32.mrb[0].mxu0
    %v1110 = vadd.f32 0.0, %v1109
    %v1111 = vpop.f32.mrb[0].mxu0
    %v1112 = vpop.f32.mrb[0].mxu0
    %1113 = vdwg.mxu0
    %1114 = vmatprep.subr.bf16.mxu0 %v1049
    %1115 = vmatpush1.bf16.msra.mxu0 %v1048
    %1116 = vmatprep.subr.bf16.mxu0 %v1053
    %1117 = vmatpush1.bf16.msra.mxu0 %v1052
    %1118 = vmatprep.subr.bf16.mxu0 %v1071
    %1119 = vmatpush1.bf16.msra.mxu0 %v1068
    %1120 = vmatprep.subr.bf16.mxu0 0
    %1121 = vmatpush1.bf16.msra.mxu0 0
    %1122 = vmatprep.subr.bf16.mxu0 0
    %1123 = vmatpush1.bf16.msra.mxu0 0
    %1124 = vmatprep.subr.bf16.mxu0 0
    %1125 = vmatpush1.bf16.msra.mxu0 0
    %1126 = vmatprep.subr.bf16.mxu0 0
    %1127 = vmatpush1.bf16.msra.mxu0 0
    %1128 = vmatprep.subr.bf16.mxu0 0
    %1129 = vmatpush1.bf16.msra.mxu0 0
    %1130 = vmatprep.subr.bf16.mxu0 0
    %1131 = vmatpush1.bf16.msra.mxu0 0
    %1132 = vmatprep.subr.bf16.mxu0 0
    %1133 = vmatpush1.bf16.msra.mxu0 0
    %1134 = vmatprep.subr.bf16.mxu0 0
    %1135 = vmatpush1.bf16.msra.mxu0 0
    %1136 = vmatprep.subr.bf16.mxu0 0
    %1137 = vmatpush1.bf16.msra.mxu0 0
    %1138 = vmatprep.subr.bf16.mxu0 0
    %1139 = vmatpush1.bf16.msra.mxu0 0
    %1140 = vmatprep.subr.bf16.mxu0 0
    %1141 = vmatpush1.bf16.msra.mxu0 0
    %1142 = vmatprep.subr.bf16.mxu0 0
    %1143 = vmatpush1.bf16.msra.mxu0 0
    %1144 = vmatprep.subr.bf16.mxu0 0
    %1145 = vmatpush1.bf16.msra.mxu0 0
    %1146 = vmatprep.mubr.bf16.mxu0 0
    %1147 = vmatmul.mubr.bf16.gmra.mrb[0].mxu0 %v1059
    %v1148 = vpop.f32.mrb[0].mxu0
    %v1149 = vadd.f32 0.0, %v1148
    %v1150 = vpop.f32.mrb[0].mxu0
    %v1151 = vadd.f32 0.0, %v1150
    %v1152 = vpop.f32.mrb[0].mxu0
    %v1153 = vpop.f32.mrb[0].mxu0
    %1154 = vdwg.mxu0
    %v1155 = vmax.f32 %v1108, 0.0
    %v1156 = vmax.f32 %v1110, 0.0
    %v1157 = vmax.f32 %v1149, 0.0
    %v1158 = vmax.f32 %v1151, 0.0
    %1159 = vrot.lane.b32.xlu0 %v1155, 16
    %v1160 = vpop.permute.xlu0 %1159
    %1161 = vrot.lane.b32.xlu0 %v1156, 16
    %v1162 = vpop.permute.xlu0 %1161
    %1163 = vrot.lane.b32.xlu0 %v1157, 16
    %v1164 = vpop.permute.xlu0 %1163
    %1165 = vrot.lane.b32.xlu0 %v1158, 16
    %v1166 = vpop.permute.xlu0 %1165
    %v1167 = vsel %vm216, %v1164, %v1166
    %v1168 = vsel %vm216, %v1162, %v1164
    %v1169 = vsel %vm216, %v1160, %v1162
    %v1170 = vsel %vm216, %v1166, %v1160
    %1171 = vrot.lane.b32.xlu0 %v1155, 112
    %v1172 = vpop.permute.xlu0 %1171
    %1173 = vrot.lane.b32.xlu0 %v1156, 112
    %v1174 = vpop.permute.xlu0 %1173
    %1175 = vrot.lane.b32.xlu0 %v1157, 112
    %v1176 = vpop.permute.xlu0 %1175
    %1177 = vrot.lane.b32.xlu0 %v1158, 112
    %v1178 = vpop.permute.xlu0 %1177
    %v1179 = vsel %vm229, %v1176, %v1178
    %v1180 = vsel %vm229, %v1174, %v1176
    %v1181 = vsel %vm229, %v1172, %v1174
    %v1182 = vsel %vm229, %v1178, %v1172
    %1183 = vrot.lane.b32.xlu0 %v1170, 1
    %v1184 = vpop.permute.xlu0 %1183
    %1185 = vrot.lane.b32.xlu0 %v1169, 1
    %v1186 = vpop.permute.xlu0 %1185
    %1187 = vrot.lane.b32.xlu0 %v1168, 1
    %v1188 = vpop.permute.xlu0 %1187
    %1189 = vrot.lane.b32.xlu0 %v1167, 1
    %v1190 = vpop.permute.xlu0 %1189
    %v1191 = vsel %vm242, %v1188, %v1190
    %v1192 = vsel %vm242, %v1186, %v1188
    %v1193 = vsel %vm242, %v1184, %v1186
    %v1194 = vsel %vm242, %v1190, %v1184
    %v1195 = vmul.f32 %v1194, %v57
    %v1196 = vmul.f32 %v1193, %v61
    %v1197 = vmul.f32 %v1192, %v65
    %v1198 = vmul.f32 %v1191, %v69
    %v1199 = vmul.f32 %v1170, %v73
    %v1200 = vmul.f32 %v1169, %v77
    %v1201 = vmul.f32 %v1168, %v81
    %v1202 = vmul.f32 %v1167, %v85
    %1203 = vrot.lane.b32.xlu0 %v1170, 127
    %v1204 = vpop.permute.xlu0 %1203
    %1205 = vrot.lane.b32.xlu0 %v1169, 127
    %v1206 = vpop.permute.xlu0 %1205
    %1207 = vrot.lane.b32.xlu0 %v1168, 127
    %v1208 = vpop.permute.xlu0 %1207
    %1209 = vrot.lane.b32.xlu0 %v1167, 127
    %v1210 = vpop.permute.xlu0 %1209
    %v1211 = vsel %vm263, %v1208, %v1210
    %v1212 = vsel %vm263, %v1206, %v1208
    %v1213 = vsel %vm263, %v1204, %v1206
    %v1214 = vsel %vm263, %v1210, %v1204
    %v1215 = vmul.f32 %v1213, %v89
    %v1216 = vmul.f32 %v1212, %v93
    %v1217 = vmul.f32 %v1211, %v97
    %v1218 = vmul.f32 %v1214, %v101
    %1219 = vrot.lane.b32.xlu0 %v1155, 1
    %v1220 = vpop.permute.xlu0 %1219
    %1221 = vrot.lane.b32.xlu0 %v1156, 1
    %v1222 = vpop.permute.xlu0 %1221
    %1223 = vrot.lane.b32.xlu0 %v1157, 1
    %v1224 = vpop.permute.xlu0 %1223
    %1225 = vrot.lane.b32.xlu0 %v1158, 1
    %v1226 = vpop.permute.xlu0 %1225
    %v1227 = vsel %vm242, %v1224, %v1226
    %v1228 = vsel %vm242, %v1222, %v1224
    %v1229 = vsel %vm242, %v1220, %v1222
    %v1230 = vsel %vm242, %v1226, %v1220
    %v1231 = vmul.f32 %v1230, %v105
    %v1232 = vmul.f32 %v1229, %v109
    %v1233 = vmul.f32 %v1228, %v113
    %v1234 = vmul.f32 %v1227, %v117
    %v1235 = vmul.f32 %v1155, %v121
    %v1236 = vmul.f32 %v1156, %v125
    %v1237 = vmul.f32 %v1157, %v129
    %v1238 = vmul.f32 %v1158, %v133
    %1239 = vrot.lane.b32.xlu0 %v1155, 127
    %v1240 = vpop.permute.xlu0 %1239
    %1241 = vrot.lane.b32.xlu0 %v1156, 127
    %v1242 = vpop.permute.xlu0 %1241
    %1243 = vrot.lane.b32.xlu0 %v1157, 127
    %v1244 = vpop.permute.xlu0 %1243
    %1245 = vrot.lane.b32.xlu0 %v1158, 127
    %v1246 = vpop.permute.xlu0 %1245
    %v1247 = vsel %vm263, %v1244, %v1246
    %v1248 = vsel %vm263, %v1242, %v1244
    %v1249 = vsel %vm263, %v1240, %v1242
    %v1250 = vsel %vm263, %v1246, %v1240
    %v1251 = vmul.f32 %v1249, %v137
    %v1252 = vmul.f32 %v1248, %v141
    %v1253 = vmul.f32 %v1247, %v145
    %v1254 = vmul.f32 %v1250, %v149
    %1255 = vrot.lane.b32.xlu0 %v1181, 1
    %v1256 = vpop.permute.xlu0 %1255
    %1257 = vrot.lane.b32.xlu0 %v1180, 1
    %v1258 = vpop.permute.xlu0 %1257
    %1259 = vrot.lane.b32.xlu0 %v1179, 1
    %v1260 = vpop.permute.xlu0 %1259
    %1261 = vrot.lane.b32.xlu0 %v1182, 1
    %v1262 = vpop.permute.xlu0 %1261
    %v1263 = vsel %vm242, %v1260, %v1262
    %v1264 = vsel %vm242, %v1258, %v1260
    %v1265 = vsel %vm242, %v1256, %v1258
    %v1266 = vsel %vm242, %v1262, %v1256
    %v1267 = vmul.f32 %v1266, %v153
    %v1268 = vmul.f32 %v1265, %v157
    %v1269 = vmul.f32 %v1264, %v161
    %v1270 = vmul.f32 %v1263, %v165
    %v1271 = vmul.f32 %v1181, %v169
    %v1272 = vmul.f32 %v1180, %v173
    %v1273 = vmul.f32 %v1179, %v177
    %v1274 = vmul.f32 %v1182, %v181
    %1275 = vrot.lane.b32.xlu0 %v1181, 127
    %v1276 = vpop.permute.xlu0 %1275
    %1277 = vrot.lane.b32.xlu0 %v1180, 127
    %v1278 = vpop.permute.xlu0 %1277
    %1279 = vrot.lane.b32.xlu0 %v1179, 127
    %v1280 = vpop.permute.xlu0 %1279
    %1281 = vrot.lane.b32.xlu0 %v1182, 127
    %v1282 = vpop.permute.xlu0 %1281
    %v1283 = vsel %vm263, %v1280, %v1282
    %v1284 = vsel %vm263, %v1278, %v1280
    %v1285 = vsel %vm263, %v1276, %v1278
    %v1286 = vsel %vm263, %v1282, %v1276
    %v1287 = vmul.f32 %v1285, %v185
    %v1288 = vmul.f32 %v1284, %v189
    %v1289 = vmul.f32 %v1283, %v193
    %v1290 = vmul.f32 %v1286, %v197
    %v1295 = vrot.slane %v1199, 4
    %v1296 = vrot.slane %v1200, 4
    %v1297 = vrot.slane %v1201, 4
    %v1298 = vrot.slane %v1202, 4
    %v1307 = vrot.slane %v1231, 4
    %v1308 = vrot.slane %v1232, 4
    %v1309 = vrot.slane %v1233, 4
    %v1310 = vrot.slane %v1234, 4
    %v1319 = vrot.slane %v1251, 4
    %v1320 = vrot.slane %v1252, 4
    %v1321 = vrot.slane %v1253, 4
    %v1322 = vrot.slane %v1254, 4
    %v1331 = vrot.slane %v1271, 4
    %v1332 = vrot.slane %v1272, 4
    %v1333 = vrot.slane %v1273, 4
    %v1334 = vrot.slane %v1274, 4
    %v1339 = vsel %vm404, %v1195, %v1295
    %v1340 = vsel %vm404, %v1196, %v1296
    %v1341 = vsel %vm404, %v1197, %v1297
    %v1342 = vsel %vm404, %v1198, %v1298
    %v1343 = vsel %vm404, %v1215, %v1307
    %v1344 = vsel %vm404, %v1216, %v1308
    %v1345 = vsel %vm404, %v1217, %v1309
    %v1346 = vsel %vm404, %v1218, %v1310
    %v1347 = vsel %vm404, %v1235, %v1319
    %v1348 = vsel %vm404, %v1236, %v1320
    %v1349 = vsel %vm404, %v1237, %v1321
    %v1350 = vsel %vm404, %v1238, %v1322
    %v1351 = vsel %vm404, %v1267, %v1331
    %v1352 = vsel %vm404, %v1268, %v1332
    %v1353 = vsel %vm404, %v1269, %v1333
    %v1354 = vsel %vm404, %v1270, %v1334
    %s1355 = scalar_lea.vmem %s2, 6
    %v1356 = vld [vmem:[%s1355] sm:$0x3]
    %v1357 = vpack.c.bf16 %v1343, %v1339
    %v1358 = vpack.c.bf16 %v1344, %v1340
    %v1359 = vpack.c.bf16 %v1345, %v1341
    %v1360 = vpack.c.bf16 %v1346, %v1342
    %v1361 = vpack.c.bf16 %v1351, %v1347
    %v1362 = vpack.c.bf16 %v1352, %v1348
    %v1363 = vpack.c.bf16 %v1353, %v1349
    %v1364 = vpack.c.bf16 %v1354, %v1350
    %v1365 = vpack.c.bf16 %v1287, %v1287
    %v1366 = vpack.c.bf16 %v1288, %v1288
    %v1367 = vpack.c.bf16 %v1289, %v1289
    %v1368 = vpack.c.bf16 %v1290, %v1290
    %v1370 = vsel %vm434, %v1356, 0
    %v1373 = vsel %vm438, %v1365, 0
    %v1376 = vsel %vm438, %v1366, 0
    %v1379 = vsel %vm438, %v1367, 0
    %v1382 = vsel %vm438, %v1368, 0
    %1384 = vmatprep.subr.bf16.mxu0 %v1358
    %1385 = vmatpush1.bf16.msra.mxu0 %v1357
    %1386 = vmatprep.subr.bf16.mxu0 %v1362
    %1387 = vmatpush1.bf16.msra.mxu0 %v1361
    %1388 = vmatprep.subr.bf16.mxu0 %v1376
    %1389 = vmatpush1.bf16.msra.mxu0 %v1373
    %1390 = vmatprep.subr.bf16.mxu0 0
    %1391 = vmatpush1.bf16.msra.mxu0 0
    %1392 = vmatprep.subr.bf16.mxu0 0
    %1393 = vmatpush1.bf16.msra.mxu0 0
    %1394 = vmatprep.subr.bf16.mxu0 0
    %1395 = vmatpush1.bf16.msra.mxu0 0
    %1396 = vmatprep.subr.bf16.mxu0 0
    %1397 = vmatpush1.bf16.msra.mxu0 0
    %1398 = vmatprep.subr.bf16.mxu0 0
    %1399 = vmatpush1.bf16.msra.mxu0 0
    %1400 = vmatprep.subr.bf16.mxu0 0
    %1401 = vmatpush1.bf16.msra.mxu0 0
    %1402 = vmatprep.subr.bf16.mxu0 0
    %1403 = vmatpush1.bf16.msra.mxu0 0
    %1404 = vmatprep.subr.bf16.mxu0 0
    %1405 = vmatpush1.bf16.msra.mxu0 0
    %1406 = vmatprep.subr.bf16.mxu0 0
    %1407 = vmatpush1.bf16.msra.mxu0 0
    %1408 = vmatprep.subr.bf16.mxu0 0
    %1409 = vmatpush1.bf16.msra.mxu0 0
    %1410 = vmatprep.subr.bf16.mxu0 0
    %1411 = vmatpush1.bf16.msra.mxu0 0
    %1412 = vmatprep.subr.bf16.mxu0 0
    %1413 = vmatpush1.bf16.msra.mxu0 0
    %1414 = vmatprep.subr.bf16.mxu0 0
    %1415 = vmatpush1.bf16.msra.mxu0 0
    %1416 = vmatprep.mubr.bf16.mxu0 0
    %1417 = vmatmul.mubr.bf16.gmra.mrb[0].mxu0 %v1370
    %v1418 = vpop.f32.mrb[0].mxu0
    %v1419 = vadd.f32 %v844, %v1418
    %v1420 = vpop.f32.mrb[0].mxu0
    %v1421 = vadd.f32 %v845, %v1420
    %v1422 = vpop.f32.mrb[0].mxu0
    %v1423 = vpop.f32.mrb[0].mxu0
    %1424 = vdwg.mxu0
    %1425 = vmatprep.subr.bf16.mxu0 %v1360
    %1426 = vmatpush1.bf16.msra.mxu0 %v1359
    %1427 = vmatprep.subr.bf16.mxu0 %v1364
    %1428 = vmatpush1.bf16.msra.mxu0 %v1363
    %1429 = vmatprep.subr.bf16.mxu0 %v1382
    %1430 = vmatpush1.bf16.msra.mxu0 %v1379
    %1431 = vmatprep.subr.bf16.mxu0 0
    %1432 = vmatpush1.bf16.msra.mxu0 0
    %1433 = vmatprep.subr.bf16.mxu0 0
    %1434 = vmatpush1.bf16.msra.mxu0 0
    %1435 = vmatprep.subr.bf16.mxu0 0
    %1436 = vmatpush1.bf16.msra.mxu0 0
    %1437 = vmatprep.subr.bf16.mxu0 0
    %1438 = vmatpush1.bf16.msra.mxu0 0
    %1439 = vmatprep.subr.bf16.mxu0 0
    %1440 = vmatpush1.bf16.msra.mxu0 0
    %1441 = vmatprep.subr.bf16.mxu0 0
    %1442 = vmatpush1.bf16.msra.mxu0 0
    %1443 = vmatprep.subr.bf16.mxu0 0
    %1444 = vmatpush1.bf16.msra.mxu0 0
    %1445 = vmatprep.subr.bf16.mxu0 0
    %1446 = vmatpush1.bf16.msra.mxu0 0
    %1447 = vmatprep.subr.bf16.mxu0 0
    %1448 = vmatpush1.bf16.msra.mxu0 0
    %1449 = vmatprep.subr.bf16.mxu0 0
    %1450 = vmatpush1.bf16.msra.mxu0 0
    %1451 = vmatprep.subr.bf16.mxu0 0
    %1452 = vmatpush1.bf16.msra.mxu0 0
    %1453 = vmatprep.subr.bf16.mxu0 0
    %1454 = vmatpush1.bf16.msra.mxu0 0
    %1455 = vmatprep.subr.bf16.mxu0 0
    %1456 = vmatpush1.bf16.msra.mxu0 0
    %1457 = vmatprep.mubr.bf16.mxu0 0
    %1458 = vmatmul.mubr.bf16.gmra.mrb[0].mxu0 %v1370
    %v1459 = vpop.f32.mrb[0].mxu0
    %v1460 = vadd.f32 %v846, %v1459
    %v1461 = vpop.f32.mrb[0].mxu0
    %v1462 = vadd.f32 %v847, %v1461
    %v1463 = vpop.f32.mrb[0].mxu0
    %v1464 = vpop.f32.mrb[0].mxu0
    %1465 = vdwg.mxu0
    %v1466 = vmax.f32 %v1419, 0.0
    %v1467 = vmax.f32 %v1421, 0.0
    %v1468 = vmax.f32 %v1460, 0.0
    %v1469 = vmax.f32 %v1462, 0.0
    %1470 = vrot.lane.b32.xlu0 %v1466, 16
    %v1471 = vpop.permute.xlu0 %1470
    %1472 = vrot.lane.b32.xlu0 %v1467, 16
    %v1473 = vpop.permute.xlu0 %1472
    %1474 = vrot.lane.b32.xlu0 %v1468, 16
    %v1475 = vpop.permute.xlu0 %1474
    %1476 = vrot.lane.b32.xlu0 %v1469, 16
    %v1477 = vpop.permute.xlu0 %1476
    %v1478 = vsel %vm216, %v1475, %v1477
    %v1479 = vsel %vm216, %v1473, %v1475
    %v1480 = vsel %vm216, %v1471, %v1473
    %v1481 = vsel %vm216, %v1477, %v1471
    %1482 = vrot.lane.b32.xlu0 %v1466, 112
    %v1483 = vpop.permute.xlu0 %1482
    %1484 = vrot.lane.b32.xlu0 %v1467, 112
    %v1485 = vpop.permute.xlu0 %1484
    %1486 = vrot.lane.b32.xlu0 %v1468, 112
    %v1487 = vpop.permute.xlu0 %1486
    %1488 = vrot.lane.b32.xlu0 %v1469, 112
    %v1489 = vpop.permute.xlu0 %1488
    %v1490 = vsel %vm229, %v1487, %v1489
    %v1491 = vsel %vm229, %v1485, %v1487
    %v1492 = vsel %vm229, %v1483, %v1485
    %v1493 = vsel %vm229, %v1489, %v1483
    %1494 = vrot.lane.b32.xlu0 %v1481, 1
    %v1495 = vpop.permute.xlu0 %1494
    %1496 = vrot.lane.b32.xlu0 %v1480, 1
    %v1497 = vpop.permute.xlu0 %1496
    %1498 = vrot.lane.b32.xlu0 %v1479, 1
    %v1499 = vpop.permute.xlu0 %1498
    %1500 = vrot.lane.b32.xlu0 %v1478, 1
    %v1501 = vpop.permute.xlu0 %1500
    %v1502 = vsel %vm242, %v1499, %v1501
    %v1503 = vsel %vm242, %v1497, %v1499
    %v1504 = vsel %vm242, %v1495, %v1497
    %v1505 = vsel %vm242, %v1501, %v1495
    %v1506 = vmul.f32 %v1505, %v57
    %v1507 = vmul.f32 %v1504, %v61
    %v1508 = vmul.f32 %v1503, %v65
    %v1509 = vmul.f32 %v1502, %v69
    %v1510 = vmul.f32 %v1481, %v73
    %v1511 = vmul.f32 %v1480, %v77
    %v1512 = vmul.f32 %v1479, %v81
    %v1513 = vmul.f32 %v1478, %v85
    %1514 = vrot.lane.b32.xlu0 %v1481, 127
    %v1515 = vpop.permute.xlu0 %1514
    %1516 = vrot.lane.b32.xlu0 %v1480, 127
    %v1517 = vpop.permute.xlu0 %1516
    %1518 = vrot.lane.b32.xlu0 %v1479, 127
    %v1519 = vpop.permute.xlu0 %1518
    %1520 = vrot.lane.b32.xlu0 %v1478, 127
    %v1521 = vpop.permute.xlu0 %1520
    %v1522 = vsel %vm263, %v1519, %v1521
    %v1523 = vsel %vm263, %v1517, %v1519
    %v1524 = vsel %vm263, %v1515, %v1517
    %v1525 = vsel %vm263, %v1521, %v1515
    %v1526 = vmul.f32 %v1524, %v89
    %v1527 = vmul.f32 %v1523, %v93
    %v1528 = vmul.f32 %v1522, %v97
    %v1529 = vmul.f32 %v1525, %v101
    %1530 = vrot.lane.b32.xlu0 %v1466, 1
    %v1531 = vpop.permute.xlu0 %1530
    %1532 = vrot.lane.b32.xlu0 %v1467, 1
    %v1533 = vpop.permute.xlu0 %1532
    %1534 = vrot.lane.b32.xlu0 %v1468, 1
    %v1535 = vpop.permute.xlu0 %1534
    %1536 = vrot.lane.b32.xlu0 %v1469, 1
    %v1537 = vpop.permute.xlu0 %1536
    %v1538 = vsel %vm242, %v1535, %v1537
    %v1539 = vsel %vm242, %v1533, %v1535
    %v1540 = vsel %vm242, %v1531, %v1533
    %v1541 = vsel %vm242, %v1537, %v1531
    %v1542 = vmul.f32 %v1541, %v105
    %v1543 = vmul.f32 %v1540, %v109
    %v1544 = vmul.f32 %v1539, %v113
    %v1545 = vmul.f32 %v1538, %v117
    %v1546 = vmul.f32 %v1466, %v121
    %v1547 = vmul.f32 %v1467, %v125
    %v1548 = vmul.f32 %v1468, %v129
    %v1549 = vmul.f32 %v1469, %v133
    %1550 = vrot.lane.b32.xlu0 %v1466, 127
    %v1551 = vpop.permute.xlu0 %1550
    %1552 = vrot.lane.b32.xlu0 %v1467, 127
    %v1553 = vpop.permute.xlu0 %1552
    %1554 = vrot.lane.b32.xlu0 %v1468, 127
    %v1555 = vpop.permute.xlu0 %1554
    %1556 = vrot.lane.b32.xlu0 %v1469, 127
    %v1557 = vpop.permute.xlu0 %1556
    %v1558 = vsel %vm263, %v1555, %v1557
    %v1559 = vsel %vm263, %v1553, %v1555
    %v1560 = vsel %vm263, %v1551, %v1553
    %v1561 = vsel %vm263, %v1557, %v1551
    %v1562 = vmul.f32 %v1560, %v137
    %v1563 = vmul.f32 %v1559, %v141
    %v1564 = vmul.f32 %v1558, %v145
    %v1565 = vmul.f32 %v1561, %v149
    %1566 = vrot.lane.b32.xlu0 %v1492, 1
    %v1567 = vpop.permute.xlu0 %1566
    %1568 = vrot.lane.b32.xlu0 %v1491, 1
    %v1569 = vpop.permute.xlu0 %1568
    %1570 = vrot.lane.b32.xlu0 %v1490, 1
    %v1571 = vpop.permute.xlu0 %1570
    %1572 = vrot.lane.b32.xlu0 %v1493, 1
    %v1573 = vpop.permute.xlu0 %1572
    %v1574 = vsel %vm242, %v1571, %v1573
    %v1575 = vsel %vm242, %v1569, %v1571
    %v1576 = vsel %vm242, %v1567, %v1569
    %v1577 = vsel %vm242, %v1573, %v1567
    %v1578 = vmul.f32 %v1577, %v153
    %v1579 = vmul.f32 %v1576, %v157
    %v1580 = vmul.f32 %v1575, %v161
    %v1581 = vmul.f32 %v1574, %v165
    %v1582 = vmul.f32 %v1492, %v169
    %v1583 = vmul.f32 %v1491, %v173
    %v1584 = vmul.f32 %v1490, %v177
    %v1585 = vmul.f32 %v1493, %v181
    %1586 = vrot.lane.b32.xlu0 %v1492, 127
    %v1587 = vpop.permute.xlu0 %1586
    %1588 = vrot.lane.b32.xlu0 %v1491, 127
    %v1589 = vpop.permute.xlu0 %1588
    %1590 = vrot.lane.b32.xlu0 %v1490, 127
    %v1591 = vpop.permute.xlu0 %1590
    %1592 = vrot.lane.b32.xlu0 %v1493, 127
    %v1593 = vpop.permute.xlu0 %1592
    %v1594 = vsel %vm263, %v1591, %v1593
    %v1595 = vsel %vm263, %v1589, %v1591
    %v1596 = vsel %vm263, %v1587, %v1589
    %v1597 = vsel %vm263, %v1593, %v1587
    %v1598 = vmul.f32 %v1596, %v185
    %v1599 = vmul.f32 %v1595, %v189
    %v1600 = vmul.f32 %v1594, %v193
    %v1601 = vmul.f32 %v1597, %v197
    %v1606 = vrot.slane %v1510, 4
    %v1607 = vrot.slane %v1511, 4
    %v1608 = vrot.slane %v1512, 4
    %v1609 = vrot.slane %v1513, 4
    %v1618 = vrot.slane %v1542, 4
    %v1619 = vrot.slane %v1543, 4
    %v1620 = vrot.slane %v1544, 4
    %v1621 = vrot.slane %v1545, 4
    %v1630 = vrot.slane %v1562, 4
    %v1631 = vrot.slane %v1563, 4
    %v1632 = vrot.slane %v1564, 4
    %v1633 = vrot.slane %v1565, 4
    %v1642 = vrot.slane %v1582, 4
    %v1643 = vrot.slane %v1583, 4
    %v1644 = vrot.slane %v1584, 4
    %v1645 = vrot.slane %v1585, 4
    %v1650 = vsel %vm404, %v1506, %v1606
    %v1651 = vsel %vm404, %v1507, %v1607
    %v1652 = vsel %vm404, %v1508, %v1608
    %v1653 = vsel %vm404, %v1509, %v1609
    %v1654 = vsel %vm404, %v1526, %v1618
    %v1655 = vsel %vm404, %v1527, %v1619
    %v1656 = vsel %vm404, %v1528, %v1620
    %v1657 = vsel %vm404, %v1529, %v1621
    %v1658 = vsel %vm404, %v1546, %v1630
    %v1659 = vsel %vm404, %v1547, %v1631
    %v1660 = vsel %vm404, %v1548, %v1632
    %v1661 = vsel %vm404, %v1549, %v1633
    %v1662 = vsel %vm404, %v1578, %v1642
    %v1663 = vsel %vm404, %v1579, %v1643
    %v1664 = vsel %vm404, %v1580, %v1644
    %v1665 = vsel %vm404, %v1581, %v1645
    %s1666 = scalar_lea.vmem %s2, 8
    %v1667 = vld [vmem:[%s1666] sm:$0x3]
    %v1668 = vpack.c.bf16 %v1654, %v1650
    %v1669 = vpack.c.bf16 %v1655, %v1651
    %v1670 = vpack.c.bf16 %v1656, %v1652
    %v1671 = vpack.c.bf16 %v1657, %v1653
    %v1672 = vpack.c.bf16 %v1662, %v1658
    %v1673 = vpack.c.bf16 %v1663, %v1659
    %v1674 = vpack.c.bf16 %v1664, %v1660
    %v1675 = vpack.c.bf16 %v1665, %v1661
    %v1676 = vpack.c.bf16 %v1598, %v1598
    %v1677 = vpack.c.bf16 %v1599, %v1599
    %v1678 = vpack.c.bf16 %v1600, %v1600
    %v1679 = vpack.c.bf16 %v1601, %v1601
    %v1681 = vsel %vm434, %v1667, 0
    %v1684 = vsel %vm438, %v1676, 0
    %v1687 = vsel %vm438, %v1677, 0
    %v1690 = vsel %vm438, %v1678, 0
    %v1693 = vsel %vm438, %v1679, 0
    %1695 = vmatprep.subr.bf16.mxu0 %v1669
    %1696 = vmatpush1.bf16.msra.mxu0 %v1668
    %1697 = vmatprep.subr.bf16.mxu0 %v1673
    %1698 = vmatpush1.bf16.msra.mxu0 %v1672
    %1699 = vmatprep.subr.bf16.mxu0 %v1687
    %1700 = vmatpush1.bf16.msra.mxu0 %v1684
    %1701 = vmatprep.subr.bf16.mxu0 0
    %1702 = vmatpush1.bf16.msra.mxu0 0
    %1703 = vmatprep.subr.bf16.mxu0 0
    %1704 = vmatpush1.bf16.msra.mxu0 0
    %1705 = vmatprep.subr.bf16.mxu0 0
    %1706 = vmatpush1.bf16.msra.mxu0 0
    %1707 = vmatprep.subr.bf16.mxu0 0
    %1708 = vmatpush1.bf16.msra.mxu0 0
    %1709 = vmatprep.subr.bf16.mxu0 0
    %1710 = vmatpush1.bf16.msra.mxu0 0
    %1711 = vmatprep.subr.bf16.mxu0 0
    %1712 = vmatpush1.bf16.msra.mxu0 0
    %1713 = vmatprep.subr.bf16.mxu0 0
    %1714 = vmatpush1.bf16.msra.mxu0 0
    %1715 = vmatprep.subr.bf16.mxu0 0
    %1716 = vmatpush1.bf16.msra.mxu0 0
    %1717 = vmatprep.subr.bf16.mxu0 0
    %1718 = vmatpush1.bf16.msra.mxu0 0
    %1719 = vmatprep.subr.bf16.mxu0 0
    %1720 = vmatpush1.bf16.msra.mxu0 0
    %1721 = vmatprep.subr.bf16.mxu0 0
    %1722 = vmatpush1.bf16.msra.mxu0 0
    %1723 = vmatprep.subr.bf16.mxu0 0
    %1724 = vmatpush1.bf16.msra.mxu0 0
    %1725 = vmatprep.subr.bf16.mxu0 0
    %1726 = vmatpush1.bf16.msra.mxu0 0
    %1727 = vmatprep.mubr.bf16.mxu0 0
    %1728 = vmatmul.mubr.bf16.gmra.mrb[0].mxu0 %v1681
    %v1729 = vpop.f32.mrb[0].mxu0
    %v1730 = vadd.f32 0.0, %v1729
    %v1731 = vpop.f32.mrb[0].mxu0
    %v1732 = vadd.f32 0.0, %v1731
    %v1733 = vpop.f32.mrb[0].mxu0
    %v1734 = vpop.f32.mrb[0].mxu0
    %1735 = vdwg.mxu0
    %1736 = vmatprep.subr.bf16.mxu0 %v1671
    %1737 = vmatpush1.bf16.msra.mxu0 %v1670
    %1738 = vmatprep.subr.bf16.mxu0 %v1675
    %1739 = vmatpush1.bf16.msra.mxu0 %v1674
    %1740 = vmatprep.subr.bf16.mxu0 %v1693
    %1741 = vmatpush1.bf16.msra.mxu0 %v1690
    %1742 = vmatprep.subr.bf16.mxu0 0
    %1743 = vmatpush1.bf16.msra.mxu0 0
    %1744 = vmatprep.subr.bf16.mxu0 0
    %1745 = vmatpush1.bf16.msra.mxu0 0
    %1746 = vmatprep.subr.bf16.mxu0 0
    %1747 = vmatpush1.bf16.msra.mxu0 0
    %1748 = vmatprep.subr.bf16.mxu0 0
    %1749 = vmatpush1.bf16.msra.mxu0 0
    %1750 = vmatprep.subr.bf16.mxu0 0
    %1751 = vmatpush1.bf16.msra.mxu0 0
    %1752 = vmatprep.subr.bf16.mxu0 0
    %1753 = vmatpush1.bf16.msra.mxu0 0
    %1754 = vmatprep.subr.bf16.mxu0 0
    %1755 = vmatpush1.bf16.msra.mxu0 0
    %1756 = vmatprep.subr.bf16.mxu0 0
    %1757 = vmatpush1.bf16.msra.mxu0 0
    %1758 = vmatprep.subr.bf16.mxu0 0
    %1759 = vmatpush1.bf16.msra.mxu0 0
    %1760 = vmatprep.subr.bf16.mxu0 0
    %1761 = vmatpush1.bf16.msra.mxu0 0
    %1762 = vmatprep.subr.bf16.mxu0 0
    %1763 = vmatpush1.bf16.msra.mxu0 0
    %1764 = vmatprep.subr.bf16.mxu0 0
    %1765 = vmatpush1.bf16.msra.mxu0 0
    %1766 = vmatprep.subr.bf16.mxu0 0
    %1767 = vmatpush1.bf16.msra.mxu0 0
    %1768 = vmatprep.mubr.bf16.mxu0 0
    %1769 = vmatmul.mubr.bf16.gmra.mrb[0].mxu0 %v1681
    %v1770 = vpop.f32.mrb[0].mxu0
    %v1771 = vadd.f32 0.0, %v1770
    %v1772 = vpop.f32.mrb[0].mxu0
    %v1773 = vadd.f32 0.0, %v1772
    %v1774 = vpop.f32.mrb[0].mxu0
    %v1775 = vpop.f32.mrb[0].mxu0
    %1776 = vdwg.mxu0
    %v1777 = vmax.f32 %v1730, 0.0
    %v1778 = vmax.f32 %v1732, 0.0
    %v1779 = vmax.f32 %v1771, 0.0
    %v1780 = vmax.f32 %v1773, 0.0
    %s1781 = sld [smem:[#allocation2]]
    %v1782 = vstv %s1781
    %v1783 = vmul.f32 %v1782, %v198
    %v1784 = vmul.f32 %v1782, %v199
    %v1787 = vcombine.high %v1783, %v1783
    %v1788 = vcombine.high %v1784, %v1784
    %v1791 = vadd.f32 %v1777, %v1783
    %v1792 = vadd.f32 %v1778, %v1787
    %v1793 = vadd.f32 %v1779, %v1784
    %v1794 = vadd.f32 %v1780, %v1788
    %v1799 = vcombine.low %v1791, %v1792
    %v1800 = vcombine.low %v1793, %v1794
    %1803 = vst [vmem:[#allocation8] sm:$0xff] %v1799
    %1804 = vst [vmem:[#allocation8 + $0x8] sm:$0xff] %v1800
    // Predicated region
    $region26: #{tpu_custom_call.1} parent=1 // pred_check
      _
    $region27: #{tpu_custom_call.1} parent=1 // pred_check_branch
      %1806 = sbr.rel (0) target = $region29
    $region28: #{tpu_custom_call.1} parent=1 // pred_region
      %s1808 = ssub.s32 256, 256
      %1809 = vsyncadd [#allocation5], %s1808
      %s1811 = sshll.u32 [#allocation8], 4
      %s1812 = int_to_ptr.vmem [resolvable:$true] %s1811
      %1814 = dma.vmem_to_hbm [thread:$0]  %s1812, 256, %s4, [#allocation5]
    $region29: #{tpu_custom_call.1} parent=1 // pred_fallthru
      _
    // Predicated region
    $region30: #{tpu_custom_call.1} parent=1 // pred_check
      _
    $region31: #{tpu_custom_call.1} parent=1 // pred_check_branch
      %1816 = sbr.rel (0) target = $region33
    $region32: #{tpu_custom_call.1} parent=1 // pred_region
      %1817 = dma.done [#allocation5], 256
    $region33: #{tpu_custom_call.1} parent=1 // pred_fallthru
      _
    %1818 = vsyncpa [#allocation4], 1
    %1819 = vsyncpa [#allocation7], 1
    %1820 = vsyncpa [#allocation5], 1

</llo_original>
